<compile_context>
chip_gen: v7x
topology: tpu7x:2x2x1
jax: 0.10.0
libtpu: 0.0.40
codegen_flags: <defaults>
</compile_context>

<pallas_src>
import functools

import jax
import jax.numpy as jnp
from jax.experimental import pallas as pl
from jax.experimental.pallas import tpu as pltpu

EPS = 1e-5


def _downscale_kernel(x_ref, w1_ref, s1_ref, b1_ref, w2_ref, s2_ref, b2_ref,
                      o_ref, pack_ref,
                      *, slope, S, Wo, Mr, B, C1, C2, M_real, compute_dtype):
    """Fused conv1(s2)+BN+LReLU -> conv2(s1)+BN+LReLU for B images.

    x_ref   : (B*Mr, 9*Cin) bf16, conv1 LHS with the 9 taps packed into K.
              Rows are B images stacked with per-image stride Mr; within an
              image, row r = oy*S + ox (columns ox >= Wo are wrap columns,
              rows >= Ho*S are pad rows -- both masked to zero below).
    w*_ref  : (9*Cin, C1) / (9*C1, C2) bf16 packed conv weights.
    s*/b*   : (1, C) f32 folded BatchNorm scale / (conv-bias + BN shift).
    o_ref   : (B*Mr, C2) bf16 flat (over-wide) output; wrapper drops wrap/pad.
    pack_ref: (B*Mr, 9*C1) bf16 VMEM scratch = conv2's packed LHS.
    """
    R = B * Mr

    # ---- conv1: ONE packed matmul (bf16 MXU, f32 accumulation) --------------
    h = jnp.dot(x_ref[...], w1_ref[...], preferred_element_type=jnp.float32)
    h = h * s1_ref[...] + b1_ref[...]            # folded BN + conv bias
    h = jnp.maximum(h, slope * h)                # LeakyReLU (0 < slope < 1)

    # Zero wrap columns and dead pad rows; these zeros double as conv2's
    # left/right/bottom zero padding.  Mask is built from an iota (no DMA).
    ridx = jax.lax.broadcasted_iota(jnp.int32, (R, C1), 0)
    rloc = ridx % Mr                             # row index within the image
    valid = ((rloc % S) < Wo) & (rloc < M_real)
    hb = jnp.where(valid, h, 0.0).astype(compute_dtype)   # single bf16 cast

    # ---- pack conv2's LHS: 9 shifted copies of hb per image -----------------
    # pack[r, t*C1:(t+1)*C1] = h_padded_flat[r + ky*S + kx], origin shift S+1.
    halo = min(S + 1, Mr)
    for b in range(B):
        base = b * Mr
        # only the halo rows can hold stale data / need zero padding
        pack_ref[base:base + halo, :] = jnp.zeros((halo, 9 * C1), compute_dtype)
        pack_ref[base + Mr - halo:base + Mr, :] = jnp.zeros(
            (halo, 9 * C1), compute_dtype)
        for ky in range(3):
            for kx in range(3):
                t = ky * 3 + kx
                d = (S + 1) - (ky * S + kx)      # static shift for this tap
                lo, hi = max(0, d), min(Mr, Mr + d)
                if lo < hi:
                    pack_ref[base + lo:base + hi, t * C1:(t + 1) * C1] = \
                        hb[base + lo - d:base + hi - d, :]

    # ---- conv2: ONE packed matmul + f32 epilogue -----------------------------
    y = jnp.dot(pack_ref[...], w2_ref[...], preferred_element_type=jnp.float32)
    y = y * s2_ref[...] + b2_ref[...]
    y = jnp.maximum(y, slope * y)
    o_ref[...] = y.astype(o_ref.dtype)


def _fold_bn(b, gamma, beta, mean, var):
    scale = gamma / jnp.sqrt(var + EPS)
    bias = (b - mean) * scale + beta
    return scale.astype(jnp.float32), bias.astype(jnp.float32)


def _taps_packed(w, compute_dtype):
    # (Cout, Cin, 3, 3) OIHW -> (9*Cin, Cout); row index = (ky*3+kx)*Cin + cin
    cout, cin = w.shape[0], w.shape[1]
    return jnp.transpose(w, (2, 3, 1, 0)).reshape(9 * cin, cout).astype(
        compute_dtype)


def _padded_bytes(shape, dtype):
    # rough VMEM footprint of one 2-D buffer incl. (sublane, lane) padding
    itemsize = jnp.dtype(dtype).itemsize
    pack = max(1, 4 // itemsize)
    sub = -(-int(shape[-2]) // (8 * pack)) * (8 * pack)
    lane = -(-int(shape[-1]) // 128) * 128
    return sub * lane * itemsize


def downscale_block(x_nchw, params, slope, compute_dtype=jnp.bfloat16):
    N, Cin, H, W = x_nchw.shape
    C1 = params["w1"].shape[0]
    C2 = params["w2"].shape[0]
    Ho, Wo = (H + 1) // 2, (W + 1) // 2

    # flat row stride: >= Wo + 2 wrap/pad columns; sublane-align when cheap
    S = Wo + 2
    if Wo >= 64:
        S = -(-S // 8) * 8
    M_real = Ho * S                         # real flat rows per image
    Mr = -(-M_real // 8) * 8                # per-image rows, sublane padded

    # fold several images into one grid step (>= ~512 rows when possible)
    B = 1
    for d in range(1, N + 1):
        if N % d == 0 and d * Mr <= max(2048, Mr):
            B = d
    R = B * Mr

    # --- layout plumbing (plain XLA): conv1 LHS with taps packed into K ------
    xt = jnp.transpose(x_nchw, (0, 2, 3, 1))                 # NHWC
    Hp, Wp = 2 * Ho + 2, 2 * S + 2
    xp = jnp.pad(xt, ((0, 0), (1, Hp - H - 1),
                      (1, Wp - W - 1), (0, 0))).astype(compute_dtype)
    taps = []
    for ky in range(3):
        for kx in range(3):
            taps.append(xp[:, ky:ky + 2 * Ho:2, kx:kx + 2 * S:2, :])
    x_lhs = jnp.concatenate(taps, axis=-1).reshape(N, M_real, 9 * Cin)
    x_lhs = jnp.pad(x_lhs, ((0, 0), (0, Mr - M_real), (0, 0)))
    x_lhs = x_lhs.reshape(N * Mr, 9 * Cin)

    w1p = _taps_packed(params["w1"], compute_dtype)          # (9*Cin, C1)
    w2p = _taps_packed(params["w2"], compute_dtype)          # (9*C1, C2)
    s1, b1 = _fold_bn(params["b1"], params["g1"], params["be1"],
                      params["m1"], params["v1"])
    s2, b2 = _fold_bn(params["b2"], params["g2"], params["be2"],
                      params["m2"], params["v2"])

    # --- generation-aware VMEM budget -----------------------------------------
    est = (2 * _padded_bytes((R, 9 * Cin), compute_dtype)     # input (2 bufs)
           + 2 * _padded_bytes((R, C2), compute_dtype)        # output (2 bufs)
           + 2 * _padded_bytes((9 * Cin, C1), compute_dtype)
           + 2 * _padded_bytes((9 * C1, C2), compute_dtype)
           + 8 * _padded_bytes((1, max(C1, C2)), jnp.float32)
           + _padded_bytes((R, 9 * C1), compute_dtype)        # pack scratch
           + _padded_bytes((R, C1), jnp.float32)              # conv1 h
           + _padded_bytes((R, C2), jnp.float32))             # conv2 y
    try:
        phys = int(pltpu.get_tpu_info().vmem_capacity_bytes)
    except Exception:
        phys = 64 * 2 ** 20
    vmem_limit = int(min(max(2 * est, 32 * 2 ** 20), (3 * phys) // 4))

    kernel = functools.partial(
        _downscale_kernel, slope=slope, S=S, Wo=Wo, Mr=Mr, B=B,
        C1=C1, C2=C2, M_real=M_real, compute_dtype=compute_dtype)

    out_flat = pl.pallas_call(
        kernel,
        out_shape=jax.ShapeDtypeStruct((N * Mr, C2), compute_dtype),
        grid_spec=pltpu.PrefetchScalarGridSpec(
            num_scalar_prefetch=0,
            grid=(N // B,),
            in_specs=[
                pl.BlockSpec((R, 9 * Cin), lambda s: (s, 0)),
                pl.BlockSpec((9 * Cin, C1), lambda s: (0, 0)),
                pl.BlockSpec((1, C1), lambda s: (0, 0)),
                pl.BlockSpec((1, C1), lambda s: (0, 0)),
                pl.BlockSpec((9 * C1, C2), lambda s: (0, 0)),
                pl.BlockSpec((1, C2), lambda s: (0, 0)),
                pl.BlockSpec((1, C2), lambda s: (0, 0)),
            ],
            out_specs=pl.BlockSpec((R, C2), lambda s: (s, 0)),
            scratch_shapes=[pltpu.VMEM((R, 9 * C1), compute_dtype)],
        ),
        compiler_params=pltpu.CompilerParams(
            dimension_semantics=("parallel",),
            vmem_limit_bytes=vmem_limit,
        ),
    )(x_lhs, w1p, s1.reshape(1, C1), b1.reshape(1, C1),
      w2p, s2.reshape(1, C2), b2.reshape(1, C2))

    # Drop pad rows / wrap columns and go back to NCHW (fused with the f32
    # cast and the transpose we need anyway -> no extra HBM pass).
    out = out_flat.astype(jnp.float32).reshape(N, Mr, C2)[:, :M_real, :]
    out = out.reshape(N, Ho, S, C2)[:, :, :Wo, :]
    return jnp.transpose(out, (0, 3, 1, 2))


def _reference_block(x_nchw, params, slope):
    def conv(x, w, b, stride):
        y = jax.lax.conv_general_dilated(
            x, w, (stride, stride), ((1, 1), (1, 1)),
            dimension_numbers=("NCHW", "OIHW", "NCHW"))
        return y + b[None, :, None, None]

    def bn(x, g, be, m, v):
        return (x - m[None, :, None, None]) / jnp.sqrt(
            v[None, :, None, None] + EPS) * g[None, :, None, None] \
            + be[None, :, None, None]

    def lrelu(x):
        return jnp.where(x > 0, x, slope * x)

    x = lrelu(bn(conv(x_nchw, params["w1"], params["b1"], 2),
                 params["g1"], params["be1"], params["m1"], params["v1"]))
    x = lrelu(bn(conv(x, params["w2"], params["b2"], 1),
                 params["g2"], params["be2"], params["m2"], params["v2"]))
    return x


def make_params(key, n):
    ks = jax.random.split(key, 12)
    p = {}
    p["w1"] = 0.1 * jax.random.normal(ks[0], (n, n, 3, 3), jnp.float32)
    p["b1"] = 0.1 * jax.random.normal(ks[1], (n,), jnp.float32)
    p["g1"] = 1.0 + 0.1 * jax.random.normal(ks[2], (n,), jnp.float32)
    p["be1"] = 0.1 * jax.random.normal(ks[3], (n,), jnp.float32)
    p["m1"] = 0.1 * jax.random.normal(ks[4], (n,), jnp.float32)
    p["v1"] = jax.random.uniform(ks[5], (n,), jnp.float32, 0.5, 1.5)
    p["w2"] = 0.1 * jax.random.normal(ks[6], (2 * n, n, 3, 3), jnp.float32)
    p["b2"] = 0.1 * jax.random.normal(ks[7], (2 * n,), jnp.float32)
    p["g2"] = 1.0 + 0.1 * jax.random.normal(ks[8], (2 * n,), jnp.float32)
    p["be2"] = 0.1 * jax.random.normal(ks[9], (2 * n,), jnp.float32)
    p["m2"] = 0.1 * jax.random.normal(ks[10], (2 * n,), jnp.float32)
    p["v2"] = jax.random.uniform(ks[11], (2 * n,), jnp.float32, 0.5, 1.5)
    return p


if __name__ == "__main__":
    key = jax.random.PRNGKey(0)
    kx_, kp = jax.random.split(key)
    N, C, H, W = 2, 4, 16, 16
    slope = 0.2
    x = jax.random.normal(kx_, (N, C, H, W), jnp.float32)
    params = make_params(kp, C)

    out = jax.jit(lambda xx: downscale_block(xx, params, slope))(x)
    out = jax.block_until_ready(out)
    assert out.shape == (N, 2 * C, H // 2, W // 2), out.shape

    # Reference uses the same bf16 quantization of x / conv weights (the
    # kernel runs its matmuls in bf16 with f32 accumulation); the extra
    # kernel-side rounding is the bf16 cast of the intermediate activation
    # and of the kernel output, hence the 2e-2 tolerance.
    params_q = dict(params)
    params_q["w1"] = params["w1"].astype(jnp.bfloat16).astype(jnp.float32)
    params_q["w2"] = params["w2"].astype(jnp.bfloat16).astype(jnp.float32)
    x_q = x.astype(jnp.bfloat16).astype(jnp.float32)
    ref = _reference_block(x_q, params_q, slope)
    err = float(jnp.max(jnp.abs(out - ref)))
    assert jnp.allclose(out, ref, atol=2e-2, rtol=2e-2), err
    print("KERNEL_OK")
</pallas_src>

<mosaic_0001>
module attributes {stable_mosaic.version = 11 : i64} {
  func.func @_downscale_kernel(%arg0: i32, %arg1: memref<160x36xbf16, #tpu.memory_space<vmem>>, %arg2: memref<36x4xbf16, #tpu.memory_space<vmem>>, %arg3: memref<1x4xf32, #tpu.memory_space<vmem>>, %arg4: memref<1x4xf32, #tpu.memory_space<vmem>>, %arg5: memref<36x8xbf16, #tpu.memory_space<vmem>>, %arg6: memref<1x8xf32, #tpu.memory_space<vmem>>, %arg7: memref<1x8xf32, #tpu.memory_space<vmem>>, %arg8: memref<160x8xbf16, #tpu.memory_space<vmem>>, %arg9: memref<160x36xbf16, #tpu.memory_space<vmem>>) attributes {dimension_semantics = [#tpu.dimension_semantics<parallel>], iteration_bounds = array<i64: 1>, scalar_prefetch = 0 : i64, scratch_operands = 1 : i64, tpu.core_type = #tpu.core_type<tc>, window_params = [{transform_indices = @transform_0, window_bounds = array<i64: 160, 36>}, {pipeline_mode = #tpu.pipeline_mode<synchronous>, transform_indices = @transform_1, window_bounds = array<i64: 36, 4>}, {pipeline_mode = #tpu.pipeline_mode<synchronous>, transform_indices = @transform_2, window_bounds = array<i64: 1, 4>}, {pipeline_mode = #tpu.pipeline_mode<synchronous>, transform_indices = @transform_3, window_bounds = array<i64: 1, 4>}, {pipeline_mode = #tpu.pipeline_mode<synchronous>, transform_indices = @transform_4, window_bounds = array<i64: 36, 8>}, {pipeline_mode = #tpu.pipeline_mode<synchronous>, transform_indices = @transform_5, window_bounds = array<i64: 1, 8>}, {pipeline_mode = #tpu.pipeline_mode<synchronous>, transform_indices = @transform_6, window_bounds = array<i64: 1, 8>}, {transform_indices = @transform_7, window_bounds = array<i64: 160, 8>}]} {
    %c0 = arith.constant 0 : index
    %c0_0 = arith.constant 0 : index
    %0 = vector.load %arg1[%c0, %c0_0] : memref<160x36xbf16, #tpu.memory_space<vmem>>, vector<160x36xbf16>
    %c0_1 = arith.constant 0 : index
    %c0_2 = arith.constant 0 : index
    %1 = vector.load %arg2[%c0_1, %c0_2] : memref<36x4xbf16, #tpu.memory_space<vmem>>, vector<36x4xbf16>
    %cst = arith.constant dense<0.000000e+00> : vector<160x4xf32>
    %2 = tpu.matmul %0, %1, %cst {dimension_numbers = #tpu.dot_dimension_numbers<[1], [0], [0], [1], [0, 0, 1, 1], [], []>} : vector<160x36xbf16>, vector<36x4xbf16>, vector<160x4xf32> -> vector<160x4xf32>
    %c0_3 = arith.constant 0 : index
    %c0_4 = arith.constant 0 : index
    %3 = vector.load %arg3[%c0_3, %c0_4] : memref<1x4xf32, #tpu.memory_space<vmem>>, vector<1x4xf32>
    %4 = vector.broadcast %3 : vector<1x4xf32> to vector<160x4xf32>
    %5 = arith.mulf %2, %4 : vector<160x4xf32>
    %c0_5 = arith.constant 0 : index
    %c0_6 = arith.constant 0 : index
    %6 = vector.load %arg4[%c0_5, %c0_6] : memref<1x4xf32, #tpu.memory_space<vmem>>, vector<1x4xf32>
    %7 = vector.broadcast %6 : vector<1x4xf32> to vector<160x4xf32>
    %8 = arith.addf %5, %7 : vector<160x4xf32>
    %cst_7 = arith.constant 2.000000e-01 : f32
    %9 = vector.broadcast %cst_7 : f32 to vector<160x4xf32>
    %10 = arith.mulf %9, %8 : vector<160x4xf32>
    %11 = arith.maximumf %8, %10 : vector<160x4xf32>
    %12 = tpu.iota {dimensions = array<i32: 0>} : vector<160x4xi32>
    %c80_i32 = arith.constant 80 : i32
    %c0_i32 = arith.constant 0 : i32
    %13 = arith.cmpi eq, %c80_i32, %c0_i32 : i32
    %c1_i32 = arith.constant 1 : i32
    %14 = arith.select %13, %c1_i32, %c80_i32 : i32
    %15 = vector.broadcast %14 : i32 to vector<160x4xi32>
    %16 = arith.remsi %12, %15 : vector<160x4xi32>
    %c0_i32_8 = arith.constant 0 : i32
    %17 = vector.broadcast %c0_i32_8 : i32 to vector<160x4xi32>
    %18 = arith.cmpi ne, %16, %17 : vector<160x4xi32>
    %c0_i32_9 = arith.constant 0 : i32
    %19 = vector.broadcast %c0_i32_9 : i32 to vector<160x4xi32>
    %20 = arith.cmpi slt, %16, %19 : vector<160x4xi32>
    %c0_i32_10 = arith.constant 0 : i32
    %21 = arith.cmpi slt, %14, %c0_i32_10 : i32
    %22 = vector.broadcast %21 : i1 to vector<160x4xi1>
    %23 = vector.broadcast %22 : vector<160x4xi1> to vector<160x4xi1>
    %24 = arith.xori %20, %23 : vector<160x4xi1>
    %25 = arith.andi %24, %18 : vector<160x4xi1>
    %26 = vector.broadcast %14 : i32 to vector<160x4xi32>
    %27 = arith.addi %16, %26 : vector<160x4xi32>
    %28 = arith.select %25, %27, %16 : vector<160x4xi1>, vector<160x4xi32>
    %c10_i32 = arith.constant 10 : i32
    %c0_i32_11 = arith.constant 0 : i32
    %29 = arith.cmpi eq, %c10_i32, %c0_i32_11 : i32
    %c1_i32_12 = arith.constant 1 : i32
    %30 = arith.select %29, %c1_i32_12, %c10_i32 : i32
    %31 = vector.broadcast %30 : i32 to vector<160x4xi32>
    %32 = arith.remsi %28, %31 : vector<160x4xi32>
    %c0_i32_13 = arith.constant 0 : i32
    %33 = vector.broadcast %c0_i32_13 : i32 to vector<160x4xi32>
    %34 = arith.cmpi ne, %32, %33 : vector<160x4xi32>
    %c0_i32_14 = arith.constant 0 : i32
    %35 = vector.broadcast %c0_i32_14 : i32 to vector<160x4xi32>
    %36 = arith.cmpi slt, %32, %35 : vector<160x4xi32>
    %c0_i32_15 = arith.constant 0 : i32
    %37 = arith.cmpi slt, %30, %c0_i32_15 : i32
    %38 = vector.broadcast %37 : i1 to vector<160x4xi1>
    %39 = vector.broadcast %38 : vector<160x4xi1> to vector<160x4xi1>
    %40 = arith.xori %36, %39 : vector<160x4xi1>
    %41 = arith.andi %40, %34 : vector<160x4xi1>
    %42 = vector.broadcast %30 : i32 to vector<160x4xi32>
    %43 = arith.addi %32, %42 : vector<160x4xi32>
    %44 = arith.select %41, %43, %32 : vector<160x4xi1>, vector<160x4xi32>
    %c8_i32 = arith.constant 8 : i32
    %45 = vector.broadcast %c8_i32 : i32 to vector<160x4xi32>
    %46 = arith.cmpi slt, %44, %45 : vector<160x4xi32>
    %c80_i32_16 = arith.constant 80 : i32
    %47 = vector.broadcast %c80_i32_16 : i32 to vector<160x4xi32>
    %48 = arith.cmpi slt, %28, %47 : vector<160x4xi32>
    %49 = arith.andi %46, %48 : vector<160x4xi1>
    %cst_17 = arith.constant 0.000000e+00 : f32
    %50 = vector.broadcast %cst_17 : f32 to vector<160x4xf32>
    %51 = arith.select %49, %11, %50 : vector<160x4xi1>, vector<160x4xf32>
    %52 = arith.truncf %51 : vector<160x4xf32> to vector<160x4xbf16>
    %cst_18 = arith.constant 0.000000e+00 : bf16
    %53 = vector.broadcast %cst_18 : bf16 to vector<11x36xbf16>
    %c0_19 = arith.constant 0 : index
    %c0_20 = arith.constant 0 : index
    %54 = vector.load %arg9[%c0_19, %c0_20] : memref<160x36xbf16, #tpu.memory_space<vmem>>, vector<11x36xbf16>
    tpu.vector_store %arg9[%c0_19, %c0_20], %53 {strides = array<i32>} : memref<160x36xbf16, #tpu.memory_space<vmem>>, vector<11x36xbf16>,
    %cst_21 = arith.constant 0.000000e+00 : bf16
    %55 = vector.broadcast %cst_21 : bf16 to vector<11x36xbf16>
    %c69 = arith.constant 69 : index
    %c0_22 = arith.constant 0 : index
    %56 = vector.load %arg9[%c69, %c0_22] : memref<160x36xbf16, #tpu.memory_space<vmem>>, vector<11x36xbf16>
    tpu.vector_store %arg9[%c69, %c0_22], %55 {strides = array<i32>} : memref<160x36xbf16, #tpu.memory_space<vmem>>, vector<11x36xbf16>,
    %57 = vector.extract_strided_slice %52 {offsets = [0, 0], sizes = [69, 4], strides = [1, 1]} : vector<160x4xbf16> to vector<69x4xbf16>
    %c11 = arith.constant 11 : index
    %c0_23 = arith.constant 0 : index
    %58 = vector.load %arg9[%c11, %c0_23] : memref<160x36xbf16, #tpu.memory_space<vmem>>, vector<69x4xbf16>
    tpu.vector_store %arg9[%c11, %c0_23], %57 {strides = array<i32>} : memref<160x36xbf16, #tpu.memory_space<vmem>>, vector<69x4xbf16>,
    %59 = vector.extract_strided_slice %52 {offsets = [0, 0], sizes = [70, 4], strides = [1, 1]} : vector<160x4xbf16> to vector<70x4xbf16>
    %c10 = arith.constant 10 : index
    %c4 = arith.constant 4 : index
    %60 = vector.load %arg9[%c10, %c4] : memref<160x36xbf16, #tpu.memory_space<vmem>>, vector<70x4xbf16>
    tpu.vector_store %arg9[%c10, %c4], %59 {strides = array<i32>} : memref<160x36xbf16, #tpu.memory_space<vmem>>, vector<70x4xbf16>,
    %61 = vector.extract_strided_slice %52 {offsets = [0, 0], sizes = [71, 4], strides = [1, 1]} : vector<160x4xbf16> to vector<71x4xbf16>
    %c9 = arith.constant 9 : index
    %c8 = arith.constant 8 : index
    %62 = vector.load %arg9[%c9, %c8] : memref<160x36xbf16, #tpu.memory_space<vmem>>, vector<71x4xbf16>
    tpu.vector_store %arg9[%c9, %c8], %61 {strides = array<i32>} : memref<160x36xbf16, #tpu.memory_space<vmem>>, vector<71x4xbf16>,
    %63 = vector.extract_strided_slice %52 {offsets = [0, 0], sizes = [79, 4], strides = [1, 1]} : vector<160x4xbf16> to vector<79x4xbf16>
    %c1 = arith.constant 1 : index
    %c12 = arith.constant 12 : index
    %64 = vector.load %arg9[%c1, %c12] : memref<160x36xbf16, #tpu.memory_space<vmem>>, vector<79x4xbf16>
    tpu.vector_store %arg9[%c1, %c12], %63 {strides = array<i32>} : memref<160x36xbf16, #tpu.memory_space<vmem>>, vector<79x4xbf16>,
    %65 = vector.extract_strided_slice %52 {offsets = [0, 0], sizes = [80, 4], strides = [1, 1]} : vector<160x4xbf16> to vector<80x4xbf16>
    %c0_24 = arith.constant 0 : index
    %c16 = arith.constant 16 : index
    %66 = vector.load %arg9[%c0_24, %c16] : memref<160x36xbf16, #tpu.memory_space<vmem>>, vector<80x4xbf16>
    tpu.vector_store %arg9[%c0_24, %c16], %65 {strides = array<i32>} : memref<160x36xbf16, #tpu.memory_space<vmem>>, vector<80x4xbf16>,
    %67 = vector.extract_strided_slice %52 {offsets = [1, 0], sizes = [79, 4], strides = [1, 1]} : vector<160x4xbf16> to vector<79x4xbf16>
    %c0_25 = arith.constant 0 : index
    %c20 = arith.constant 20 : index
    %68 = vector.load %arg9[%c0_25, %c20] : memref<160x36xbf16, #tpu.memory_space<vmem>>, vector<79x4xbf16>
    tpu.vector_store %arg9[%c0_25, %c20], %67 {strides = array<i32>} : memref<160x36xbf16, #tpu.memory_space<vmem>>, vector<79x4xbf16>,
    %69 = vector.extract_strided_slice %52 {offsets = [9, 0], sizes = [71, 4], strides = [1, 1]} : vector<160x4xbf16> to vector<71x4xbf16>
    %c0_26 = arith.constant 0 : index
    %c24 = arith.constant 24 : index
    %70 = vector.load %arg9[%c0_26, %c24] : memref<160x36xbf16, #tpu.memory_space<vmem>>, vector<71x4xbf16>
    tpu.vector_store %arg9[%c0_26, %c24], %69 {strides = array<i32>} : memref<160x36xbf16, #tpu.memory_space<vmem>>, vector<71x4xbf16>,
    %71 = vector.extract_strided_slice %52 {offsets = [10, 0], sizes = [70, 4], strides = [1, 1]} : vector<160x4xbf16> to vector<70x4xbf16>
    %c0_27 = arith.constant 0 : index
    %c28 = arith.constant 28 : index
    %72 = vector.load %arg9[%c0_27, %c28] : memref<160x36xbf16, #tpu.memory_space<vmem>>, vector<70x4xbf16>
    tpu.vector_store %arg9[%c0_27, %c28], %71 {strides = array<i32>} : memref<160x36xbf16, #tpu.memory_space<vmem>>, vector<70x4xbf16>,
    %73 = vector.extract_strided_slice %52 {offsets = [11, 0], sizes = [69, 4], strides = [1, 1]} : vector<160x4xbf16> to vector<69x4xbf16>
    %c0_28 = arith.constant 0 : index
    %c32 = arith.constant 32 : index
    %74 = vector.load %arg9[%c0_28, %c32] : memref<160x36xbf16, #tpu.memory_space<vmem>>, vector<69x4xbf16>
    tpu.vector_store %arg9[%c0_28, %c32], %73 {strides = array<i32>} : memref<160x36xbf16, #tpu.memory_space<vmem>>, vector<69x4xbf16>,
    %cst_29 = arith.constant 0.000000e+00 : bf16
    %75 = vector.broadcast %cst_29 : bf16 to vector<11x36xbf16>
    %c80 = arith.constant 80 : index
    %c0_30 = arith.constant 0 : index
    %76 = vector.load %arg9[%c80, %c0_30] : memref<160x36xbf16, #tpu.memory_space<vmem>>, vector<11x36xbf16>
    tpu.vector_store %arg9[%c80, %c0_30], %75 {strides = array<i32>} : memref<160x36xbf16, #tpu.memory_space<vmem>>, vector<11x36xbf16>,
    %cst_31 = arith.constant 0.000000e+00 : bf16
    %77 = vector.broadcast %cst_31 : bf16 to vector<11x36xbf16>
    %c149 = arith.constant 149 : index
    %c0_32 = arith.constant 0 : index
    %78 = vector.load %arg9[%c149, %c0_32] : memref<160x36xbf16, #tpu.memory_space<vmem>>, vector<11x36xbf16>
    tpu.vector_store %arg9[%c149, %c0_32], %77 {strides = array<i32>} : memref<160x36xbf16, #tpu.memory_space<vmem>>, vector<11x36xbf16>,
    %79 = vector.extract_strided_slice %52 {offsets = [80, 0], sizes = [69, 4], strides = [1, 1]} : vector<160x4xbf16> to vector<69x4xbf16>
    %c91 = arith.constant 91 : index
    %c0_33 = arith.constant 0 : index
    %80 = vector.load %arg9[%c91, %c0_33] : memref<160x36xbf16, #tpu.memory_space<vmem>>, vector<69x4xbf16>
    tpu.vector_store %arg9[%c91, %c0_33], %79 {strides = array<i32>} : memref<160x36xbf16, #tpu.memory_space<vmem>>, vector<69x4xbf16>,
    %81 = vector.extract_strided_slice %52 {offsets = [80, 0], sizes = [70, 4], strides = [1, 1]} : vector<160x4xbf16> to vector<70x4xbf16>
    %c90 = arith.constant 90 : index
    %c4_34 = arith.constant 4 : index
    %82 = vector.load %arg9[%c90, %c4_34] : memref<160x36xbf16, #tpu.memory_space<vmem>>, vector<70x4xbf16>
    tpu.vector_store %arg9[%c90, %c4_34], %81 {strides = array<i32>} : memref<160x36xbf16, #tpu.memory_space<vmem>>, vector<70x4xbf16>,
    %83 = vector.extract_strided_slice %52 {offsets = [80, 0], sizes = [71, 4], strides = [1, 1]} : vector<160x4xbf16> to vector<71x4xbf16>
    %c89 = arith.constant 89 : index
    %c8_35 = arith.constant 8 : index
    %84 = vector.load %arg9[%c89, %c8_35] : memref<160x36xbf16, #tpu.memory_space<vmem>>, vector<71x4xbf16>
    tpu.vector_store %arg9[%c89, %c8_35], %83 {strides = array<i32>} : memref<160x36xbf16, #tpu.memory_space<vmem>>, vector<71x4xbf16>,
    %85 = vector.extract_strided_slice %52 {offsets = [80, 0], sizes = [79, 4], strides = [1, 1]} : vector<160x4xbf16> to vector<79x4xbf16>
    %c81 = arith.constant 81 : index
    %c12_36 = arith.constant 12 : index
    %86 = vector.load %arg9[%c81, %c12_36] : memref<160x36xbf16, #tpu.memory_space<vmem>>, vector<79x4xbf16>
    tpu.vector_store %arg9[%c81, %c12_36], %85 {strides = array<i32>} : memref<160x36xbf16, #tpu.memory_space<vmem>>, vector<79x4xbf16>,
    %87 = vector.extract_strided_slice %52 {offsets = [80, 0], sizes = [80, 4], strides = [1, 1]} : vector<160x4xbf16> to vector<80x4xbf16>
    %c80_37 = arith.constant 80 : index
    %c16_38 = arith.constant 16 : index
    %88 = vector.load %arg9[%c80_37, %c16_38] : memref<160x36xbf16, #tpu.memory_space<vmem>>, vector<80x4xbf16>
    tpu.vector_store %arg9[%c80_37, %c16_38], %87 {strides = array<i32>} : memref<160x36xbf16, #tpu.memory_space<vmem>>, vector<80x4xbf16>,
    %89 = vector.extract_strided_slice %52 {offsets = [81, 0], sizes = [79, 4], strides = [1, 1]} : vector<160x4xbf16> to vector<79x4xbf16>
    %c80_39 = arith.constant 80 : index
    %c20_40 = arith.constant 20 : index
    %90 = vector.load %arg9[%c80_39, %c20_40] : memref<160x36xbf16, #tpu.memory_space<vmem>>, vector<79x4xbf16>
    tpu.vector_store %arg9[%c80_39, %c20_40], %89 {strides = array<i32>} : memref<160x36xbf16, #tpu.memory_space<vmem>>, vector<79x4xbf16>,
    %91 = vector.extract_strided_slice %52 {offsets = [89, 0], sizes = [71, 4], strides = [1, 1]} : vector<160x4xbf16> to vector<71x4xbf16>
    %c80_41 = arith.constant 80 : index
    %c24_42 = arith.constant 24 : index
    %92 = vector.load %arg9[%c80_41, %c24_42] : memref<160x36xbf16, #tpu.memory_space<vmem>>, vector<71x4xbf16>
    tpu.vector_store %arg9[%c80_41, %c24_42], %91 {strides = array<i32>} : memref<160x36xbf16, #tpu.memory_space<vmem>>, vector<71x4xbf16>,
    %93 = vector.extract_strided_slice %52 {offsets = [90, 0], sizes = [70, 4], strides = [1, 1]} : vector<160x4xbf16> to vector<70x4xbf16>
    %c80_43 = arith.constant 80 : index
    %c28_44 = arith.constant 28 : index
    %94 = vector.load %arg9[%c80_43, %c28_44] : memref<160x36xbf16, #tpu.memory_space<vmem>>, vector<70x4xbf16>
    tpu.vector_store %arg9[%c80_43, %c28_44], %93 {strides = array<i32>} : memref<160x36xbf16, #tpu.memory_space<vmem>>, vector<70x4xbf16>,
    %95 = vector.extract_strided_slice %52 {offsets = [91, 0], sizes = [69, 4], strides = [1, 1]} : vector<160x4xbf16> to vector<69x4xbf16>
    %c80_45 = arith.constant 80 : index
    %c32_46 = arith.constant 32 : index
    %96 = vector.load %arg9[%c80_45, %c32_46] : memref<160x36xbf16, #tpu.memory_space<vmem>>, vector<69x4xbf16>
    tpu.vector_store %arg9[%c80_45, %c32_46], %95 {strides = array<i32>} : memref<160x36xbf16, #tpu.memory_space<vmem>>, vector<69x4xbf16>,
    %c0_47 = arith.constant 0 : index
    %c0_48 = arith.constant 0 : index
    %97 = vector.load %arg9[%c0_47, %c0_48] : memref<160x36xbf16, #tpu.memory_space<vmem>>, vector<160x36xbf16>
    %c0_49 = arith.constant 0 : index
    %c0_50 = arith.constant 0 : index
    %98 = vector.load %arg5[%c0_49, %c0_50] : memref<36x8xbf16, #tpu.memory_space<vmem>>, vector<36x8xbf16>
    %cst_51 = arith.constant dense<0.000000e+00> : vector<160x8xf32>
    %99 = tpu.matmul %97, %98, %cst_51 {dimension_numbers = #tpu.dot_dimension_numbers<[1], [0], [0], [1], [0, 0, 1, 1], [], []>} : vector<160x36xbf16>, vector<36x8xbf16>, vector<160x8xf32> -> vector<160x8xf32>
    %c0_52 = arith.constant 0 : index
    %c0_53 = arith.constant 0 : index
    %100 = vector.load %arg6[%c0_52, %c0_53] : memref<1x8xf32, #tpu.memory_space<vmem>>, vector<1x8xf32>
    %101 = vector.broadcast %100 : vector<1x8xf32> to vector<160x8xf32>
    %102 = arith.mulf %99, %101 : vector<160x8xf32>
    %c0_54 = arith.constant 0 : index
    %c0_55 = arith.constant 0 : index
    %103 = vector.load %arg7[%c0_54, %c0_55] : memref<1x8xf32, #tpu.memory_space<vmem>>, vector<1x8xf32>
    %104 = vector.broadcast %103 : vector<1x8xf32> to vector<160x8xf32>
    %105 = arith.addf %102, %104 : vector<160x8xf32>
    %cst_56 = arith.constant 2.000000e-01 : f32
    %106 = vector.broadcast %cst_56 : f32 to vector<160x8xf32>
    %107 = arith.mulf %106, %105 : vector<160x8xf32>
    %108 = arith.maximumf %105, %107 : vector<160x8xf32>
    %109 = arith.truncf %108 : vector<160x8xf32> to vector<160x8xbf16>
    %c0_57 = arith.constant 0 : index
    %c0_58 = arith.constant 0 : index
    %110 = vector.load %arg8[%c0_57, %c0_58] : memref<160x8xbf16, #tpu.memory_space<vmem>>, vector<160x8xbf16>
    tpu.vector_store %arg8[%c0_57, %c0_58], %109 {strides = array<i32>} : memref<160x8xbf16, #tpu.memory_space<vmem>>, vector<160x8xbf16>,
    return
  }
  func.func @transform_0(%arg0: i32) -> (i32, i32) {
    %c0_i32 = arith.constant 0 : i32
    %c0_i32_0 = arith.constant 0 : i32
    return %arg0, %c0_i32 : i32, i32
  }
  func.func @transform_1(%arg0: i32) -> (i32, i32) {
    %c0_i32 = arith.constant 0 : i32
    %c0_i32_0 = arith.constant 0 : i32
    %c0_i32_1 = arith.constant 0 : i32
    return %c0_i32, %c0_i32_0 : i32, i32
  }
  func.func @transform_2(%arg0: i32) -> (i32, i32) {
    %c0_i32 = arith.constant 0 : i32
    %c0_i32_0 = arith.constant 0 : i32
    %c0_i32_1 = arith.constant 0 : i32
    return %c0_i32, %c0_i32_0 : i32, i32
  }
  func.func @transform_3(%arg0: i32) -> (i32, i32) {
    %c0_i32 = arith.constant 0 : i32
    %c0_i32_0 = arith.constant 0 : i32
    %c0_i32_1 = arith.constant 0 : i32
    return %c0_i32, %c0_i32_0 : i32, i32
  }
  func.func @transform_4(%arg0: i32) -> (i32, i32) {
    %c0_i32 = arith.constant 0 : i32
    %c0_i32_0 = arith.constant 0 : i32
    %c0_i32_1 = arith.constant 0 : i32
    return %c0_i32, %c0_i32_0 : i32, i32
  }
  func.func @transform_5(%arg0: i32) -> (i32, i32) {
    %c0_i32 = arith.constant 0 : i32
    %c0_i32_0 = arith.constant 0 : i32
    %c0_i32_1 = arith.constant 0 : i32
    return %c0_i32, %c0_i32_0 : i32, i32
  }
  func.func @transform_6(%arg0: i32) -> (i32, i32) {
    %c0_i32 = arith.constant 0 : i32
    %c0_i32_0 = arith.constant 0 : i32
    %c0_i32_1 = arith.constant 0 : i32
    return %c0_i32, %c0_i32_0 : i32, i32
  }
  func.func @transform_7(%arg0: i32) -> (i32, i32) {
    %c0_i32 = arith.constant 0 : i32
    %c0_i32_0 = arith.constant 0 : i32
    return %arg0, %c0_i32 : i32, i32
  }
}

</mosaic_0001>

<llo_original>
// kernel: _lambda_.1
$region0: #{_lambda_.1}
  #allocation0 [shape = 'u32[]', space=smem, size = 0x4, offset = 0x4, fixed_abs, tag = 'smem constant byte address 0x4 - core index']
  #allocation1 [shape = 'u32[144,128]{1,0:T(1,128)}', space=vmem, size = 0x12000, scoped, tag = 'internal scratch']
  #allocation2 [shape = 'bf16[160,36]{1,0:T(16,128)(2,1)}', space=vmem, size = 0xa000, scoped, tag = 'scratch operand']
  %s0 = inlined_call_operand.vmem [shape: bf16[160,36], index: 0, kind: input, shape index: {}]
  %s1 = inlined_call_operand.vmem [shape: bf16[36,4], index: 1, kind: input, shape index: {}]
  %s2 = inlined_call_operand.vmem [shape: f32[1,4], index: 2, kind: input, shape index: {}]
  %s3 = inlined_call_operand.vmem [shape: f32[1,4], index: 3, kind: input, shape index: {}]
  %s4 = inlined_call_operand.vmem [shape: bf16[36,8], index: 4, kind: input, shape index: {}]
  %s5 = inlined_call_operand.vmem [shape: f32[1,8], index: 5, kind: input, shape index: {}]
  %s6 = inlined_call_operand.vmem [shape: f32[1,8], index: 6, kind: input, shape index: {}]
  %s7 = inlined_call_operand.vmem [shape: bf16[160,8], index: 7, kind: output, shape index: {}]
  %s8 = sld [smem:[#allocation0]]
  $region38: #{_lambda_.1} parent=0
    _
  %s10 = ssub.s32 1, %s8
  %s11 = scalar_select 0, %s10, %s8
  // Predicated region
  $region2: #{_lambda_.1} parent=0 // pred_check
    _
  $region3: #{_lambda_.1} parent=0 // pred_check_branch
    %13 = sbr.rel (0) target = $region5
  $region4: #{_lambda_.1} parent=0 // pred_region
    _
  $region5: #{_lambda_.1} parent=0 // pred_fallthru
    _
  // Predicated region
  $region6: #{_lambda_.1} parent=0 // pred_check
    _
  $region7: #{_lambda_.1} parent=0 // pred_check_branch
    %15 = sbr.rel (0) target = $region9
  $region8: #{_lambda_.1} parent=0 // pred_region
    _
  $region9: #{_lambda_.1} parent=0 // pred_fallthru
    _
  // Predicated region
  $region10: #{_lambda_.1} parent=0 // pred_check
    _
  $region11: #{_lambda_.1} parent=0 // pred_check_branch
    %17 = sbr.rel (0) target = $region13
  $region12: #{_lambda_.1} parent=0 // pred_region
    _
  $region13: #{_lambda_.1} parent=0 // pred_fallthru
    _
  // Predicated region
  $region14: #{_lambda_.1} parent=0 // pred_check
    _
  $region15: #{_lambda_.1} parent=0 // pred_check_branch
    %19 = sbr.rel (0) target = $region17
  $region16: #{_lambda_.1} parent=0 // pred_region
    _
  $region17: #{_lambda_.1} parent=0 // pred_fallthru
    _
  // Predicated region
  $region18: #{_lambda_.1} parent=0 // pred_check
    _
  $region19: #{_lambda_.1} parent=0 // pred_check_branch
    %21 = sbr.rel (0) target = $region21
  $region20: #{_lambda_.1} parent=0 // pred_region
    _
  $region21: #{_lambda_.1} parent=0 // pred_fallthru
    _
  // Predicated region
  $region22: #{_lambda_.1} parent=0 // pred_check
    _
  $region23: #{_lambda_.1} parent=0 // pred_check_branch
    %23 = sbr.rel (0) target = $region25
  $region24: #{_lambda_.1} parent=0 // pred_region
    _
  $region25: #{_lambda_.1} parent=0 // pred_fallthru
    _
  // Predicated region
  $region26: #{_lambda_.1} parent=0 // pred_check
    _
  $region27: #{_lambda_.1} parent=0 // pred_check_branch
    %25 = sbr.rel (0) target = $region29
  $region28: #{_lambda_.1} parent=0 // pred_region
    _
  $region29: #{_lambda_.1} parent=0 // pred_fallthru
    _
  %v27 = vld [vmem:[%s0] sm:$0xf]
  %v28 = vld [vmem:[%s0 + $0x4] sm:$0xf]
  %v29 = vld [vmem:[%s0 + $0x8] sm:$0xf]
  %v30 = vld [vmem:[%s0 + $0xc] sm:$0xf]
  %v31 = vld [vmem:[%s0 + $0x10] sm:$0xf]
  %v32 = vld [vmem:[%s0 + $0x14] sm:$0xf]
  %v33 = vld [vmem:[%s0 + $0x18] sm:$0xf]
  %v34 = vld [vmem:[%s0 + $0x1c] sm:$0xf]
  %v35 = vld [vmem:[%s0 + $0x20] sm:$0xf]
  %v36 = vld [vmem:[%s0 + $0x24] sm:$0xf]
  %v37 = vld [vmem:[%s0 + $0x28] sm:$0xf]
  %v38 = vld [vmem:[%s0 + $0x2c] sm:$0xf]
  %v39 = vld [vmem:[%s0 + $0x30] sm:$0xf]
  %v40 = vld [vmem:[%s0 + $0x34] sm:$0xf]
  %v41 = vld [vmem:[%s0 + $0x38] sm:$0xf]
  %v42 = vld [vmem:[%s0 + $0x3c] sm:$0xf]
  %v43 = vld [vmem:[%s0 + $0x40] sm:$0xf]
  %v44 = vld [vmem:[%s0 + $0x44] sm:$0xf]
  %v45 = vld [vmem:[%s0 + $0x48] sm:$0xf]
  %v46 = vld [vmem:[%s0 + $0x4c] sm:$0xf]
  %v47 = vld [vmem:[%s1] sm:$0xf]
  %v48 = vld [vmem:[%s1 + $0x4] sm:$0xf]
  %v49 = vld [vmem:[%s1 + $0x8] sm:$0xf]
  %v50 = vld [vmem:[%s1 + $0xc] sm:$0xf]
  %v51 = vld [vmem:[%s1 + $0x10] sm:$0x3]
  %v72 = vunpack.c.l.b16 %v27
  %v73 = vunpack.c.l.b16 %v28
  %v74 = vunpack.c.l.b16 %v29
  %v75 = vunpack.c.l.b16 %v30
  %v76 = vunpack.c.l.b16 %v31
  %v77 = vunpack.c.l.b16 %v32
  %v78 = vunpack.c.l.b16 %v33
  %v79 = vunpack.c.l.b16 %v34
  %v80 = vunpack.c.l.b16 %v35
  %v81 = vunpack.c.l.b16 %v36
  %v82 = vunpack.c.l.b16 %v37
  %v83 = vunpack.c.l.b16 %v38
  %v84 = vunpack.c.l.b16 %v39
  %v85 = vunpack.c.l.b16 %v40
  %v86 = vunpack.c.l.b16 %v41
  %v87 = vunpack.c.l.b16 %v42
  %v88 = vunpack.c.l.b16 %v43
  %v89 = vunpack.c.l.b16 %v44
  %v90 = vunpack.c.l.b16 %v45
  %v91 = vunpack.c.l.b16 %v46
  %v92 = vpack.c.b16 %v73, %v72
  %v93 = vpack.c.b16 %v75, %v74
  %v94 = vpack.c.b16 %v77, %v76
  %v95 = vpack.c.b16 %v79, %v78
  %v96 = vpack.c.b16 %v81, %v80
  %v97 = vpack.c.b16 %v83, %v82
  %v98 = vpack.c.b16 %v85, %v84
  %v99 = vpack.c.b16 %v87, %v86
  %v100 = vpack.c.b16 %v89, %v88
  %v101 = vpack.c.b16 %v91, %v90
  %v107 = vunpack.c.l.b16 %v47
  %v108 = vunpack.c.l.b16 %v48
  %v109 = vunpack.c.l.b16 %v49
  %v110 = vunpack.c.l.b16 %v50
  %v111 = vunpack.c.l.b16 %v51
  %v112 = vpack.c.b16 %v108, %v107
  %v113 = vpack.c.b16 %v110, %v109
  %v114 = vpack.c.b16 %v111, %v111
  %vm117 = vcmask 293888
  %v119 = vsel %vm117, %v92, 0
  %v122 = vsel %vm117, %v93, 0
  %v125 = vsel %vm117, %v94, 0
  %v128 = vsel %vm117, %v95, 0
  %v131 = vsel %vm117, %v96, 0
  %v134 = vsel %vm117, %v97, 0
  %v137 = vsel %vm117, %v98, 0
  %v140 = vsel %vm117, %v99, 0
  %v143 = vsel %vm117, %v100, 0
  %v146 = vsel %vm117, %v101, 0
  %vm148 = vcmask 1041408
  %v150 = vsel %vm148, %v114, 0
  %152 = vmatprep.subr.bf16.mxu0 0
  %153 = vmatpush1.bf16.msra.mxu0 %v112
  %154 = vmatprep.subr.bf16.mxu0 0
  %155 = vmatpush1.bf16.msra.mxu0 %v113
  %156 = vmatprep.subr.bf16.mxu0 0
  %157 = vmatpush1.bf16.msra.mxu0 %v150
  %158 = vmatprep.subr.bf16.mxu0 0
  %159 = vmatpush1.bf16.msra.mxu0 0
  %160 = vmatprep.subr.bf16.mxu0 0
  %161 = vmatpush1.bf16.msra.mxu0 0
  %162 = vmatprep.subr.bf16.mxu0 0
  %163 = vmatpush1.bf16.msra.mxu0 0
  %164 = vmatprep.subr.bf16.mxu0 0
  %165 = vmatpush1.bf16.msra.mxu0 0
  %166 = vmatprep.subr.bf16.mxu0 0
  %167 = vmatpush1.bf16.msra.mxu0 0
  %168 = vmatprep.subr.bf16.mxu0 0
  %169 = vmatpush1.bf16.msra.mxu0 0
  %170 = vmatprep.subr.bf16.mxu0 0
  %171 = vmatpush1.bf16.msra.mxu0 0
  %172 = vmatprep.subr.bf16.mxu0 0
  %173 = vmatpush1.bf16.msra.mxu0 0
  %174 = vmatprep.subr.bf16.mxu0 0
  %175 = vmatpush1.bf16.msra.mxu0 0
  %176 = vmatprep.subr.bf16.mxu0 0
  %177 = vmatpush1.bf16.msra.mxu0 0
  %178 = vmatprep.subr.bf16.mxu0 0
  %179 = vmatpush1.bf16.msra.mxu0 0
  %180 = vmatprep.subr.bf16.mxu0 0
  %181 = vmatpush1.bf16.msra.mxu0 0
  %182 = vmatprep.subr.bf16.mxu0 0
  %183 = vmatpush1.bf16.msra.mxu0 0
  %184 = vmatprep.mubr.bf16.mxu0 0
  %185 = vmatmul.mubr.bf16.gmra.mrb[0].mxu0 %v119
  %v186 = vpop.f32.mrb[0].mxu0
  %v187 = vadd.f32 0.0, %v186
  %v188 = vpop.f32.mrb[0].mxu0
  %v189 = vpop.f32.mrb[0].mxu0
  %v190 = vadd.f32 0.0, %v189
  %v191 = vpop.f32.mrb[0].mxu0
  %192 = vmatprep.mubr.bf16.mxu0 0
  %193 = vmatmul.mubr.bf16.gmra.mrb[0].mxu0 %v122
  %v194 = vpop.f32.mrb[0].mxu0
  %v195 = vadd.f32 0.0, %v194
  %v196 = vpop.f32.mrb[0].mxu0
  %v197 = vpop.f32.mrb[0].mxu0
  %v198 = vadd.f32 0.0, %v197
  %v199 = vpop.f32.mrb[0].mxu0
  %200 = vmatprep.mubr.bf16.mxu0 0
  %201 = vmatmul.mubr.bf16.gmra.mrb[0].mxu0 %v125
  %v202 = vpop.f32.mrb[0].mxu0
  %v203 = vadd.f32 0.0, %v202
  %v204 = vpop.f32.mrb[0].mxu0
  %v205 = vpop.f32.mrb[0].mxu0
  %v206 = vadd.f32 0.0, %v205
  %v207 = vpop.f32.mrb[0].mxu0
  %208 = vmatprep.mubr.bf16.mxu0 0
  %209 = vmatmul.mubr.bf16.gmra.mrb[0].mxu0 %v128
  %v210 = vpop.f32.mrb[0].mxu0
  %v211 = vadd.f32 0.0, %v210
  %v212 = vpop.f32.mrb[0].mxu0
  %v213 = vpop.f32.mrb[0].mxu0
  %v214 = vadd.f32 0.0, %v213
  %v215 = vpop.f32.mrb[0].mxu0
  %216 = vmatprep.mubr.bf16.mxu0 0
  %217 = vmatmul.mubr.bf16.gmra.mrb[0].mxu0 %v131
  %v218 = vpop.f32.mrb[0].mxu0
  %v219 = vadd.f32 0.0, %v218
  %v220 = vpop.f32.mrb[0].mxu0
  %v221 = vpop.f32.mrb[0].mxu0
  %v222 = vadd.f32 0.0, %v221
  %v223 = vpop.f32.mrb[0].mxu0
  %224 = vmatprep.mubr.bf16.mxu0 0
  %225 = vmatmul.mubr.bf16.gmra.mrb[0].mxu0 %v134
  %v226 = vpop.f32.mrb[0].mxu0
  %v227 = vadd.f32 0.0, %v226
  %v228 = vpop.f32.mrb[0].mxu0
  %v229 = vpop.f32.mrb[0].mxu0
  %v230 = vadd.f32 0.0, %v229
  %v231 = vpop.f32.mrb[0].mxu0
  %232 = vmatprep.mubr.bf16.mxu0 0
  %233 = vmatmul.mubr.bf16.gmra.mrb[0].mxu0 %v137
  %v234 = vpop.f32.mrb[0].mxu0
  %v235 = vadd.f32 0.0, %v234
  %v236 = vpop.f32.mrb[0].mxu0
  %v237 = vpop.f32.mrb[0].mxu0
  %v238 = vadd.f32 0.0, %v237
  %v239 = vpop.f32.mrb[0].mxu0
  %240 = vmatprep.mubr.bf16.mxu0 0
  %241 = vmatmul.mubr.bf16.gmra.mrb[0].mxu0 %v140
  %v242 = vpop.f32.mrb[0].mxu0
  %v243 = vadd.f32 0.0, %v242
  %v244 = vpop.f32.mrb[0].mxu0
  %v245 = vpop.f32.mrb[0].mxu0
  %v246 = vadd.f32 0.0, %v245
  %v247 = vpop.f32.mrb[0].mxu0
  %248 = vmatprep.mubr.bf16.mxu0 0
  %249 = vmatmul.mubr.bf16.gmra.mrb[0].mxu0 %v143
  %v250 = vpop.f32.mrb[0].mxu0
  %v251 = vadd.f32 0.0, %v250
  %v252 = vpop.f32.mrb[0].mxu0
  %v253 = vpop.f32.mrb[0].mxu0
  %v254 = vadd.f32 0.0, %v253
  %v255 = vpop.f32.mrb[0].mxu0
  %256 = vmatprep.mubr.bf16.mxu0 0
  %257 = vmatmul.mubr.bf16.gmra.mrb[0].mxu0 %v146
  %v258 = vpop.f32.mrb[0].mxu0
  %v259 = vadd.f32 0.0, %v258
  %v260 = vpop.f32.mrb[0].mxu0
  %v261 = vpop.f32.mrb[0].mxu0
  %v262 = vadd.f32 0.0, %v261
  %v263 = vpop.f32.mrb[0].mxu0
  %264 = vdwg.mxu0
  %v265 = vld [vmem:[%s2] sm:$0x1]
  %v267 = vlaneseq
  %v268 = vshrl.u32 %v267, 7
  %v269 = vsub.s32 0, %v268
  %v270 = vrot.slane %v265, %v269
  %v272 = vmul.f32 %v187, %v270
  %v273 = vmul.f32 %v190, %v270
  %v274 = vmul.f32 %v195, %v270
  %v275 = vmul.f32 %v198, %v270
  %v276 = vmul.f32 %v203, %v270
  %v277 = vmul.f32 %v206, %v270
  %v278 = vmul.f32 %v211, %v270
  %v279 = vmul.f32 %v214, %v270
  %v280 = vmul.f32 %v219, %v270
  %v281 = vmul.f32 %v222, %v270
  %v282 = vmul.f32 %v227, %v270
  %v283 = vmul.f32 %v230, %v270
  %v284 = vmul.f32 %v235, %v270
  %v285 = vmul.f32 %v238, %v270
  %v286 = vmul.f32 %v243, %v270
  %v287 = vmul.f32 %v246, %v270
  %v288 = vmul.f32 %v251, %v270
  %v289 = vmul.f32 %v254, %v270
  %v290 = vmul.f32 %v259, %v270
  %v291 = vmul.f32 %v262, %v270
  %v292 = vld [vmem:[%s3] sm:$0x1]
  %v294 = vlaneseq
  %v295 = vshrl.u32 %v294, 7
  %v296 = vsub.s32 0, %v295
  %v297 = vrot.slane %v292, %v296
  %v299 = vadd.f32 %v272, %v297
  %v300 = vadd.f32 %v273, %v297
  %v301 = vadd.f32 %v274, %v297
  %v302 = vadd.f32 %v275, %v297
  %v303 = vadd.f32 %v276, %v297
  %v304 = vadd.f32 %v277, %v297
  %v305 = vadd.f32 %v278, %v297
  %v306 = vadd.f32 %v279, %v297
  %v307 = vadd.f32 %v280, %v297
  %v308 = vadd.f32 %v281, %v297
  %v309 = vadd.f32 %v282, %v297
  %v310 = vadd.f32 %v283, %v297
  %v311 = vadd.f32 %v284, %v297
  %v312 = vadd.f32 %v285, %v297
  %v313 = vadd.f32 %v286, %v297
  %v314 = vadd.f32 %v287, %v297
  %v315 = vadd.f32 %v288, %v297
  %v316 = vadd.f32 %v289, %v297
  %v317 = vadd.f32 %v290, %v297
  %v318 = vadd.f32 %v291, %v297
  %v319 = vmul.f32 %v299, 0.2
  %v320 = vmul.f32 %v300, 0.2
  %v321 = vmul.f32 %v301, 0.2
  %v322 = vmul.f32 %v302, 0.2
  %v323 = vmul.f32 %v303, 0.2
  %v324 = vmul.f32 %v304, 0.2
  %v325 = vmul.f32 %v305, 0.2
  %v326 = vmul.f32 %v306, 0.2
  %v327 = vmul.f32 %v307, 0.2
  %v328 = vmul.f32 %v308, 0.2
  %v329 = vmul.f32 %v309, 0.2
  %v330 = vmul.f32 %v310, 0.2
  %v331 = vmul.f32 %v311, 0.2
  %v332 = vmul.f32 %v312, 0.2
  %v333 = vmul.f32 %v313, 0.2
  %v334 = vmul.f32 %v314, 0.2
  %v335 = vmul.f32 %v315, 0.2
  %v336 = vmul.f32 %v316, 0.2
  %v337 = vmul.f32 %v317, 0.2
  %v338 = vmul.f32 %v318, 0.2
  %v339 = vmax.f32 %v299, %v319
  %v340 = vmax.f32 %v300, %v320
  %v341 = vmax.f32 %v301, %v321
  %v342 = vmax.f32 %v302, %v322
  %v343 = vmax.f32 %v303, %v323
  %v344 = vmax.f32 %v304, %v324
  %v345 = vmax.f32 %v305, %v325
  %v346 = vmax.f32 %v306, %v326
  %v347 = vmax.f32 %v307, %v327
  %v348 = vmax.f32 %v308, %v328
  %v349 = vmax.f32 %v309, %v329
  %v350 = vmax.f32 %v310, %v330
  %v351 = vmax.f32 %v311, %v331
  %v352 = vmax.f32 %v312, %v332
  %v353 = vmax.f32 %v313, %v333
  %v354 = vmax.f32 %v314, %v334
  %v355 = vmax.f32 %v315, %v335
  %v356 = vmax.f32 %v316, %v336
  %v357 = vmax.f32 %v317, %v337
  %v358 = vmax.f32 %v318, %v338
  %v359 = vlaneseq
  %v360 = vshrl.u32 %v359, 7
  %v361 = vadd.s32 %v360, 8
  %v362 = vadd.s32 %v360, 16
  %v363 = vadd.s32 %v360, 24
  %v364 = vadd.s32 %v360, 32
  %v365 = vadd.s32 %v360, 40
  %v366 = vadd.s32 %v360, 48
  %v367 = vadd.s32 %v360, 56
  %v368 = vadd.s32 %v360, 64
  %v369 = vadd.s32 %v360, 72
  %v370 = vadd.s32 %v360, 80
  %v371 = vadd.s32 %v360, 88
  %v372 = vadd.s32 %v360, 96
  %v373 = vadd.s32 %v360, 104
  %v374 = vadd.s32 %v360, 112
  %v375 = vadd.s32 %v360, 120
  %v376 = vadd.s32 %v360, 128
  %v377 = vadd.s32 %v360, 136
  %v378 = vadd.s32 %v360, 144
  %v379 = vadd.s32 %v360, 152
  %vm380 = vcmp.lt.s32.totalorder %v360, 0
  %v381 = vsub.s32 0, %v360
  %v382 = vsel %vm380, %v381, %v360
  %v383 = vmul.u32.u64.compose %v382, 3435973837
  %v384 = vextract.low.u32 %v383
  %v385 = vextract.high.u32 %v383
  %v386 = vshrl.u32 %v385, 6
  %v387 = vmul.u32 %v386, 80
  %v388 = vsub.s32 %v382, %v387
  %v389 = vsub.s32 0, %v388
  %v390 = vsel %vm380, %v389, %v388
  %vm391 = vcmp.lt.s32.totalorder %v361, 0
  %v392 = vsub.s32 0, %v361
  %v393 = vsel %vm391, %v392, %v361
  %v394 = vmul.u32.u64.compose %v393, 3435973837
  %v395 = vextract.low.u32 %v394
  %v396 = vextract.high.u32 %v394
  %v397 = vshrl.u32 %v396, 6
  %v398 = vmul.u32 %v397, 80
  %v399 = vsub.s32 %v393, %v398
  %v400 = vsub.s32 0, %v399
  %v401 = vsel %vm391, %v400, %v399
  %vm402 = vcmp.lt.s32.totalorder %v362, 0
  %v403 = vsub.s32 0, %v362
  %v404 = vsel %vm402, %v403, %v362
  %v405 = vmul.u32.u64.compose %v404, 3435973837
  %v406 = vextract.low.u32 %v405
  %v407 = vextract.high.u32 %v405
  %v408 = vshrl.u32 %v407, 6
  %v409 = vmul.u32 %v408, 80
  %v410 = vsub.s32 %v404, %v409
  %v411 = vsub.s32 0, %v410
  %v412 = vsel %vm402, %v411, %v410
  %vm413 = vcmp.lt.s32.totalorder %v363, 0
  %v414 = vsub.s32 0, %v363
  %v415 = vsel %vm413, %v414, %v363
  %v416 = vmul.u32.u64.compose %v415, 3435973837
  %v417 = vextract.low.u32 %v416
  %v418 = vextract.high.u32 %v416
  %v419 = vshrl.u32 %v418, 6
  %v420 = vmul.u32 %v419, 80
  %v421 = vsub.s32 %v415, %v420
  %v422 = vsub.s32 0, %v421
  %v423 = vsel %vm413, %v422, %v421
  %vm424 = vcmp.lt.s32.totalorder %v364, 0
  %v425 = vsub.s32 0, %v364
  %v426 = vsel %vm424, %v425, %v364
  %v427 = vmul.u32.u64.compose %v426, 3435973837
  %v428 = vextract.low.u32 %v427
  %v429 = vextract.high.u32 %v427
  %v430 = vshrl.u32 %v429, 6
  %v431 = vmul.u32 %v430, 80
  %v432 = vsub.s32 %v426, %v431
  %v433 = vsub.s32 0, %v432
  %v434 = vsel %vm424, %v433, %v432
  %vm435 = vcmp.lt.s32.totalorder %v365, 0
  %v436 = vsub.s32 0, %v365
  %v437 = vsel %vm435, %v436, %v365
  %v438 = vmul.u32.u64.compose %v437, 3435973837
  %v439 = vextract.low.u32 %v438
  %v440 = vextract.high.u32 %v438
  %v441 = vshrl.u32 %v440, 6
  %v442 = vmul.u32 %v441, 80
  %v443 = vsub.s32 %v437, %v442
  %v444 = vsub.s32 0, %v443
  %v445 = vsel %vm435, %v444, %v443
  %vm446 = vcmp.lt.s32.totalorder %v366, 0
  %v447 = vsub.s32 0, %v366
  %v448 = vsel %vm446, %v447, %v366
  %v449 = vmul.u32.u64.compose %v448, 3435973837
  %v450 = vextract.low.u32 %v449
  %v451 = vextract.high.u32 %v449
  %v452 = vshrl.u32 %v451, 6
  %v453 = vmul.u32 %v452, 80
  %v454 = vsub.s32 %v448, %v453
  %v455 = vsub.s32 0, %v454
  %v456 = vsel %vm446, %v455, %v454
  %vm457 = vcmp.lt.s32.totalorder %v367, 0
  %v458 = vsub.s32 0, %v367
  %v459 = vsel %vm457, %v458, %v367
  %v460 = vmul.u32.u64.compose %v459, 3435973837
  %v461 = vextract.low.u32 %v460
  %v462 = vextract.high.u32 %v460
  %v463 = vshrl.u32 %v462, 6
  %v464 = vmul.u32 %v463, 80
  %v465 = vsub.s32 %v459, %v464
  %v466 = vsub.s32 0, %v465
  %v467 = vsel %vm457, %v466, %v465
  %vm468 = vcmp.lt.s32.totalorder %v368, 0
  %v469 = vsub.s32 0, %v368
  %v470 = vsel %vm468, %v469, %v368
  %v471 = vmul.u32.u64.compose %v470, 3435973837
  %v472 = vextract.low.u32 %v471
  %v473 = vextract.high.u32 %v471
  %v474 = vshrl.u32 %v473, 6
  %v475 = vmul.u32 %v474, 80
  %v476 = vsub.s32 %v470, %v475
  %v477 = vsub.s32 0, %v476
  %v478 = vsel %vm468, %v477, %v476
  %vm479 = vcmp.lt.s32.totalorder %v369, 0
  %v480 = vsub.s32 0, %v369
  %v481 = vsel %vm479, %v480, %v369
  %v482 = vmul.u32.u64.compose %v481, 3435973837
  %v483 = vextract.low.u32 %v482
  %v484 = vextract.high.u32 %v482
  %v485 = vshrl.u32 %v484, 6
  %v486 = vmul.u32 %v485, 80
  %v487 = vsub.s32 %v481, %v486
  %v488 = vsub.s32 0, %v487
  %v489 = vsel %vm479, %v488, %v487
  %vm490 = vcmp.lt.s32.totalorder %v370, 0
  %v491 = vsub.s32 0, %v370
  %v492 = vsel %vm490, %v491, %v370
  %v493 = vmul.u32.u64.compose %v492, 3435973837
  %v494 = vextract.low.u32 %v493
  %v495 = vextract.high.u32 %v493
  %v496 = vshrl.u32 %v495, 6
  %v497 = vmul.u32 %v496, 80
  %v498 = vsub.s32 %v492, %v497
  %v499 = vsub.s32 0, %v498
  %v500 = vsel %vm490, %v499, %v498
  %vm501 = vcmp.lt.s32.totalorder %v371, 0
  %v502 = vsub.s32 0, %v371
  %v503 = vsel %vm501, %v502, %v371
  %v504 = vmul.u32.u64.compose %v503, 3435973837
  %v505 = vextract.low.u32 %v504
  %v506 = vextract.high.u32 %v504
  %v507 = vshrl.u32 %v506, 6
  %v508 = vmul.u32 %v507, 80
  %v509 = vsub.s32 %v503, %v508
  %v510 = vsub.s32 0, %v509
  %v511 = vsel %vm501, %v510, %v509
  %vm512 = vcmp.lt.s32.totalorder %v372, 0
  %v513 = vsub.s32 0, %v372
  %v514 = vsel %vm512, %v513, %v372
  %v515 = vmul.u32.u64.compose %v514, 3435973837
  %v516 = vextract.low.u32 %v515
  %v517 = vextract.high.u32 %v515
  %v518 = vshrl.u32 %v517, 6
  %v519 = vmul.u32 %v518, 80
  %v520 = vsub.s32 %v514, %v519
  %v521 = vsub.s32 0, %v520
  %v522 = vsel %vm512, %v521, %v520
  %vm523 = vcmp.lt.s32.totalorder %v373, 0
  %v524 = vsub.s32 0, %v373
  %v525 = vsel %vm523, %v524, %v373
  %v526 = vmul.u32.u64.compose %v525, 3435973837
  %v527 = vextract.low.u32 %v526
  %v528 = vextract.high.u32 %v526
  %v529 = vshrl.u32 %v528, 6
  %v530 = vmul.u32 %v529, 80
  %v531 = vsub.s32 %v525, %v530
  %v532 = vsub.s32 0, %v531
  %v533 = vsel %vm523, %v532, %v531
  %vm534 = vcmp.lt.s32.totalorder %v374, 0
  %v535 = vsub.s32 0, %v374
  %v536 = vsel %vm534, %v535, %v374
  %v537 = vmul.u32.u64.compose %v536, 3435973837
  %v538 = vextract.low.u32 %v537
  %v539 = vextract.high.u32 %v537
  %v540 = vshrl.u32 %v539, 6
  %v541 = vmul.u32 %v540, 80
  %v542 = vsub.s32 %v536, %v541
  %v543 = vsub.s32 0, %v542
  %v544 = vsel %vm534, %v543, %v542
  %vm545 = vcmp.lt.s32.totalorder %v375, 0
  %v546 = vsub.s32 0, %v375
  %v547 = vsel %vm545, %v546, %v375
  %v548 = vmul.u32.u64.compose %v547, 3435973837
  %v549 = vextract.low.u32 %v548
  %v550 = vextract.high.u32 %v548
  %v551 = vshrl.u32 %v550, 6
  %v552 = vmul.u32 %v551, 80
  %v553 = vsub.s32 %v547, %v552
  %v554 = vsub.s32 0, %v553
  %v555 = vsel %vm545, %v554, %v553
  %vm556 = vcmp.lt.s32.totalorder %v376, 0
  %v557 = vsub.s32 0, %v376
  %v558 = vsel %vm556, %v557, %v376
  %v559 = vmul.u32.u64.compose %v558, 3435973837
  %v560 = vextract.low.u32 %v559
  %v561 = vextract.high.u32 %v559
  %v562 = vshrl.u32 %v561, 6
  %v563 = vmul.u32 %v562, 80
  %v564 = vsub.s32 %v558, %v563
  %v565 = vsub.s32 0, %v564
  %v566 = vsel %vm556, %v565, %v564
  %vm567 = vcmp.lt.s32.totalorder %v377, 0
  %v568 = vsub.s32 0, %v377
  %v569 = vsel %vm567, %v568, %v377
  %v570 = vmul.u32.u64.compose %v569, 3435973837
  %v571 = vextract.low.u32 %v570
  %v572 = vextract.high.u32 %v570
  %v573 = vshrl.u32 %v572, 6
  %v574 = vmul.u32 %v573, 80
  %v575 = vsub.s32 %v569, %v574
  %v576 = vsub.s32 0, %v575
  %v577 = vsel %vm567, %v576, %v575
  %vm578 = vcmp.lt.s32.totalorder %v378, 0
  %v579 = vsub.s32 0, %v378
  %v580 = vsel %vm578, %v579, %v378
  %v581 = vmul.u32.u64.compose %v580, 3435973837
  %v582 = vextract.low.u32 %v581
  %v583 = vextract.high.u32 %v581
  %v584 = vshrl.u32 %v583, 6
  %v585 = vmul.u32 %v584, 80
  %v586 = vsub.s32 %v580, %v585
  %v587 = vsub.s32 0, %v586
  %v588 = vsel %vm578, %v587, %v586
  %vm589 = vcmp.lt.s32.totalorder %v379, 0
  %v590 = vsub.s32 0, %v379
  %v591 = vsel %vm589, %v590, %v379
  %v592 = vmul.u32.u64.compose %v591, 3435973837
  %v593 = vextract.low.u32 %v592
  %v594 = vextract.high.u32 %v592
  %v595 = vshrl.u32 %v594, 6
  %v596 = vmul.u32 %v595, 80
  %v597 = vsub.s32 %v591, %v596
  %v598 = vsub.s32 0, %v597
  %v599 = vsel %vm589, %v598, %v597
  %vm600 = vcmp.ne.s32.totalorder %v390, 0
  %vm601 = vcmp.ne.s32.totalorder %v401, 0
  %vm602 = vcmp.ne.s32.totalorder %v412, 0
  %vm603 = vcmp.ne.s32.totalorder %v423, 0
  %vm604 = vcmp.ne.s32.totalorder %v434, 0
  %vm605 = vcmp.ne.s32.totalorder %v445, 0
  %vm606 = vcmp.ne.s32.totalorder %v456, 0
  %vm607 = vcmp.ne.s32.totalorder %v467, 0
  %vm608 = vcmp.ne.s32.totalorder %v478, 0
  %vm609 = vcmp.ne.s32.totalorder %v489, 0
  %vm610 = vcmp.ne.s32.totalorder %v500, 0
  %vm611 = vcmp.ne.s32.totalorder %v511, 0
  %vm612 = vcmp.ne.s32.totalorder %v522, 0
  %vm613 = vcmp.ne.s32.totalorder %v533, 0
  %vm614 = vcmp.ne.s32.totalorder %v544, 0
  %vm615 = vcmp.ne.s32.totalorder %v555, 0
  %vm616 = vcmp.ne.s32.totalorder %v566, 0
  %vm617 = vcmp.ne.s32.totalorder %v577, 0
  %vm618 = vcmp.ne.s32.totalorder %v588, 0
  %vm619 = vcmp.ne.s32.totalorder %v599, 0
  %vm620 = vcmp.lt.s32.totalorder %v390, 0
  %vm621 = vcmp.lt.s32.totalorder %v401, 0
  %vm622 = vcmp.lt.s32.totalorder %v412, 0
  %vm623 = vcmp.lt.s32.totalorder %v423, 0
  %vm624 = vcmp.lt.s32.totalorder %v434, 0
  %vm625 = vcmp.lt.s32.totalorder %v445, 0
  %vm626 = vcmp.lt.s32.totalorder %v456, 0
  %vm627 = vcmp.lt.s32.totalorder %v467, 0
  %vm628 = vcmp.lt.s32.totalorder %v478, 0
  %vm629 = vcmp.lt.s32.totalorder %v489, 0
  %vm630 = vcmp.lt.s32.totalorder %v500, 0
  %vm631 = vcmp.lt.s32.totalorder %v511, 0
  %vm632 = vcmp.lt.s32.totalorder %v522, 0
  %vm633 = vcmp.lt.s32.totalorder %v533, 0
  %vm634 = vcmp.lt.s32.totalorder %v544, 0
  %vm635 = vcmp.lt.s32.totalorder %v555, 0
  %vm636 = vcmp.lt.s32.totalorder %v566, 0
  %vm637 = vcmp.lt.s32.totalorder %v577, 0
  %vm638 = vcmp.lt.s32.totalorder %v588, 0
  %vm639 = vcmp.lt.s32.totalorder %v599, 0
  %vm640 = vmand %vm620, %vm600
  %vm641 = vmand %vm621, %vm601
  %vm642 = vmand %vm622, %vm602
  %vm643 = vmand %vm623, %vm603
  %vm644 = vmand %vm624, %vm604
  %vm645 = vmand %vm625, %vm605
  %vm646 = vmand %vm626, %vm606
  %vm647 = vmand %vm627, %vm607
  %vm648 = vmand %vm628, %vm608
  %vm649 = vmand %vm629, %vm609
  %vm650 = vmand %vm630, %vm610
  %vm651 = vmand %vm631, %vm611
  %vm652 = vmand %vm632, %vm612
  %vm653 = vmand %vm633, %vm613
  %vm654 = vmand %vm634, %vm614
  %vm655 = vmand %vm635, %vm615
  %vm656 = vmand %vm636, %vm616
  %vm657 = vmand %vm637, %vm617
  %vm658 = vmand %vm638, %vm618
  %vm659 = vmand %vm639, %vm619
  %v660 = vadd.s32 %v390, 80
  %v661 = vadd.s32 %v401, 80
  %v662 = vadd.s32 %v412, 80
  %v663 = vadd.s32 %v423, 80
  %v664 = vadd.s32 %v434, 80
  %v665 = vadd.s32 %v445, 80
  %v666 = vadd.s32 %v456, 80
  %v667 = vadd.s32 %v467, 80
  %v668 = vadd.s32 %v478, 80
  %v669 = vadd.s32 %v489, 80
  %v670 = vadd.s32 %v500, 80
  %v671 = vadd.s32 %v511, 80
  %v672 = vadd.s32 %v522, 80
  %v673 = vadd.s32 %v533, 80
  %v674 = vadd.s32 %v544, 80
  %v675 = vadd.s32 %v555, 80
  %v676 = vadd.s32 %v566, 80
  %v677 = vadd.s32 %v577, 80
  %v678 = vadd.s32 %v588, 80
  %v679 = vadd.s32 %v599, 80
  %v680 = vsel %vm640, %v660, %v390
  %v681 = vsel %vm641, %v661, %v401
  %v682 = vsel %vm642, %v662, %v412
  %v683 = vsel %vm643, %v663, %v423
  %v684 = vsel %vm644, %v664, %v434
  %v685 = vsel %vm645, %v665, %v445
  %v686 = vsel %vm646, %v666, %v456
  %v687 = vsel %vm647, %v667, %v467
  %v688 = vsel %vm648, %v668, %v478
  %v689 = vsel %vm649, %v669, %v489
  %v690 = vsel %vm650, %v670, %v500
  %v691 = vsel %vm651, %v671, %v511
  %v692 = vsel %vm652, %v672, %v522
  %v693 = vsel %vm653, %v673, %v533
  %v694 = vsel %vm654, %v674, %v544
  %v695 = vsel %vm655, %v675, %v555
  %v696 = vsel %vm656, %v676, %v566
  %v697 = vsel %vm657, %v677, %v577
  %v698 = vsel %vm658, %v678, %v588
  %v699 = vsel %vm659, %v679, %v599
  %vm700 = vcmp.lt.s32.totalorder %v680, 0
  %v701 = vsub.s32 0, %v680
  %v702 = vsel %vm700, %v701, %v680
  %v703 = vmul.u32.u64.compose %v702, 3435973837
  %v704 = vextract.low.u32 %v703
  %v705 = vextract.high.u32 %v703
  %v706 = vshrl.u32 %v705, 3
  %v707 = vmul.u32 %v706, 10
  %v708 = vsub.s32 %v702, %v707
  %v709 = vsub.s32 0, %v708
  %v710 = vsel %vm700, %v709, %v708
  %vm711 = vcmp.lt.s32.totalorder %v681, 0
  %v712 = vsub.s32 0, %v681
  %v713 = vsel %vm711, %v712, %v681
  %v714 = vmul.u32.u64.compose %v713, 3435973837
  %v715 = vextract.low.u32 %v714
  %v716 = vextract.high.u32 %v714
  %v717 = vshrl.u32 %v716, 3
  %v718 = vmul.u32 %v717, 10
  %v719 = vsub.s32 %v713, %v718
  %v720 = vsub.s32 0, %v719
  %v721 = vsel %vm711, %v720, %v719
  %vm722 = vcmp.lt.s32.totalorder %v682, 0
  %v723 = vsub.s32 0, %v682
  %v724 = vsel %vm722, %v723, %v682
  %v725 = vmul.u32.u64.compose %v724, 3435973837
  %v726 = vextract.low.u32 %v725
  %v727 = vextract.high.u32 %v725
  %v728 = vshrl.u32 %v727, 3
  %v729 = vmul.u32 %v728, 10
  %v730 = vsub.s32 %v724, %v729
  %v731 = vsub.s32 0, %v730
  %v732 = vsel %vm722, %v731, %v730
  %vm733 = vcmp.lt.s32.totalorder %v683, 0
  %v734 = vsub.s32 0, %v683
  %v735 = vsel %vm733, %v734, %v683
  %v736 = vmul.u32.u64.compose %v735, 3435973837
  %v737 = vextract.low.u32 %v736
  %v738 = vextract.high.u32 %v736
  %v739 = vshrl.u32 %v738, 3
  %v740 = vmul.u32 %v739, 10
  %v741 = vsub.s32 %v735, %v740
  %v742 = vsub.s32 0, %v741
  %v743 = vsel %vm733, %v742, %v741
  %vm744 = vcmp.lt.s32.totalorder %v684, 0
  %v745 = vsub.s32 0, %v684
  %v746 = vsel %vm744, %v745, %v684
  %v747 = vmul.u32.u64.compose %v746, 3435973837
  %v748 = vextract.low.u32 %v747
  %v749 = vextract.high.u32 %v747
  %v750 = vshrl.u32 %v749, 3
  %v751 = vmul.u32 %v750, 10
  %v752 = vsub.s32 %v746, %v751
  %v753 = vsub.s32 0, %v752
  %v754 = vsel %vm744, %v753, %v752
  %vm755 = vcmp.lt.s32.totalorder %v685, 0
  %v756 = vsub.s32 0, %v685
  %v757 = vsel %vm755, %v756, %v685
  %v758 = vmul.u32.u64.compose %v757, 3435973837
  %v759 = vextract.low.u32 %v758
  %v760 = vextract.high.u32 %v758
  %v761 = vshrl.u32 %v760, 3
  %v762 = vmul.u32 %v761, 10
  %v763 = vsub.s32 %v757, %v762
  %v764 = vsub.s32 0, %v763
  %v765 = vsel %vm755, %v764, %v763
  %vm766 = vcmp.lt.s32.totalorder %v686, 0
  %v767 = vsub.s32 0, %v686
  %v768 = vsel %vm766, %v767, %v686
  %v769 = vmul.u32.u64.compose %v768, 3435973837
  %v770 = vextract.low.u32 %v769
  %v771 = vextract.high.u32 %v769
  %v772 = vshrl.u32 %v771, 3
  %v773 = vmul.u32 %v772, 10
  %v774 = vsub.s32 %v768, %v773
  %v775 = vsub.s32 0, %v774
  %v776 = vsel %vm766, %v775, %v774
  %vm777 = vcmp.lt.s32.totalorder %v687, 0
  %v778 = vsub.s32 0, %v687
  %v779 = vsel %vm777, %v778, %v687
  %v780 = vmul.u32.u64.compose %v779, 3435973837
  %v781 = vextract.low.u32 %v780
  %v782 = vextract.high.u32 %v780
  %v783 = vshrl.u32 %v782, 3
  %v784 = vmul.u32 %v783, 10
  %v785 = vsub.s32 %v779, %v784
  %v786 = vsub.s32 0, %v785
  %v787 = vsel %vm777, %v786, %v785
  %vm788 = vcmp.lt.s32.totalorder %v688, 0
  %v789 = vsub.s32 0, %v688
  %v790 = vsel %vm788, %v789, %v688
  %v791 = vmul.u32.u64.compose %v790, 3435973837
  %v792 = vextract.low.u32 %v791
  %v793 = vextract.high.u32 %v791
  %v794 = vshrl.u32 %v793, 3
  %v795 = vmul.u32 %v794, 10
  %v796 = vsub.s32 %v790, %v795
  %v797 = vsub.s32 0, %v796
  %v798 = vsel %vm788, %v797, %v796
  %vm799 = vcmp.lt.s32.totalorder %v689, 0
  %v800 = vsub.s32 0, %v689
  %v801 = vsel %vm799, %v800, %v689
  %v802 = vmul.u32.u64.compose %v801, 3435973837
  %v803 = vextract.low.u32 %v802
  %v804 = vextract.high.u32 %v802
  %v805 = vshrl.u32 %v804, 3
  %v806 = vmul.u32 %v805, 10
  %v807 = vsub.s32 %v801, %v806
  %v808 = vsub.s32 0, %v807
  %v809 = vsel %vm799, %v808, %v807
  %vm810 = vcmp.lt.s32.totalorder %v690, 0
  %v811 = vsub.s32 0, %v690
  %v812 = vsel %vm810, %v811, %v690
  %v813 = vmul.u32.u64.compose %v812, 3435973837
  %v814 = vextract.low.u32 %v813
  %v815 = vextract.high.u32 %v813
  %v816 = vshrl.u32 %v815, 3
  %v817 = vmul.u32 %v816, 10
  %v818 = vsub.s32 %v812, %v817
  %v819 = vsub.s32 0, %v818
  %v820 = vsel %vm810, %v819, %v818
  %vm821 = vcmp.lt.s32.totalorder %v691, 0
  %v822 = vsub.s32 0, %v691
  %v823 = vsel %vm821, %v822, %v691
  %v824 = vmul.u32.u64.compose %v823, 3435973837
  %v825 = vextract.low.u32 %v824
  %v826 = vextract.high.u32 %v824
  %v827 = vshrl.u32 %v826, 3
  %v828 = vmul.u32 %v827, 10
  %v829 = vsub.s32 %v823, %v828
  %v830 = vsub.s32 0, %v829
  %v831 = vsel %vm821, %v830, %v829
  %vm832 = vcmp.lt.s32.totalorder %v692, 0
  %v833 = vsub.s32 0, %v692
  %v834 = vsel %vm832, %v833, %v692
  %v835 = vmul.u32.u64.compose %v834, 3435973837
  %v836 = vextract.low.u32 %v835
  %v837 = vextract.high.u32 %v835
  %v838 = vshrl.u32 %v837, 3
  %v839 = vmul.u32 %v838, 10
  %v840 = vsub.s32 %v834, %v839
  %v841 = vsub.s32 0, %v840
  %v842 = vsel %vm832, %v841, %v840
  %vm843 = vcmp.lt.s32.totalorder %v693, 0
  %v844 = vsub.s32 0, %v693
  %v845 = vsel %vm843, %v844, %v693
  %v846 = vmul.u32.u64.compose %v845, 3435973837
  %v847 = vextract.low.u32 %v846
  %v848 = vextract.high.u32 %v846
  %v849 = vshrl.u32 %v848, 3
  %v850 = vmul.u32 %v849, 10
  %v851 = vsub.s32 %v845, %v850
  %v852 = vsub.s32 0, %v851
  %v853 = vsel %vm843, %v852, %v851
  %vm854 = vcmp.lt.s32.totalorder %v694, 0
  %v855 = vsub.s32 0, %v694
  %v856 = vsel %vm854, %v855, %v694
  %v857 = vmul.u32.u64.compose %v856, 3435973837
  %v858 = vextract.low.u32 %v857
  %v859 = vextract.high.u32 %v857
  %v860 = vshrl.u32 %v859, 3
  %v861 = vmul.u32 %v860, 10
  %v862 = vsub.s32 %v856, %v861
  %v863 = vsub.s32 0, %v862
  %v864 = vsel %vm854, %v863, %v862
  %vm865 = vcmp.lt.s32.totalorder %v695, 0
  %v866 = vsub.s32 0, %v695
  %v867 = vsel %vm865, %v866, %v695
  %v868 = vmul.u32.u64.compose %v867, 3435973837
  %v869 = vextract.low.u32 %v868
  %v870 = vextract.high.u32 %v868
  %v871 = vshrl.u32 %v870, 3
  %v872 = vmul.u32 %v871, 10
  %v873 = vsub.s32 %v867, %v872
  %v874 = vsub.s32 0, %v873
  %v875 = vsel %vm865, %v874, %v873
  %vm876 = vcmp.lt.s32.totalorder %v696, 0
  %v877 = vsub.s32 0, %v696
  %v878 = vsel %vm876, %v877, %v696
  %v879 = vmul.u32.u64.compose %v878, 3435973837
  %v880 = vextract.low.u32 %v879
  %v881 = vextract.high.u32 %v879
  %v882 = vshrl.u32 %v881, 3
  %v883 = vmul.u32 %v882, 10
  %v884 = vsub.s32 %v878, %v883
  %v885 = vsub.s32 0, %v884
  %v886 = vsel %vm876, %v885, %v884
  %vm887 = vcmp.lt.s32.totalorder %v697, 0
  %v888 = vsub.s32 0, %v697
  %v889 = vsel %vm887, %v888, %v697
  %v890 = vmul.u32.u64.compose %v889, 3435973837
  %v891 = vextract.low.u32 %v890
  %v892 = vextract.high.u32 %v890
  %v893 = vshrl.u32 %v892, 3
  %v894 = vmul.u32 %v893, 10
  %v895 = vsub.s32 %v889, %v894
  %v896 = vsub.s32 0, %v895
  %v897 = vsel %vm887, %v896, %v895
  %vm898 = vcmp.lt.s32.totalorder %v698, 0
  %v899 = vsub.s32 0, %v698
  %v900 = vsel %vm898, %v899, %v698
  %v901 = vmul.u32.u64.compose %v900, 3435973837
  %v902 = vextract.low.u32 %v901
  %v903 = vextract.high.u32 %v901
  %v904 = vshrl.u32 %v903, 3
  %v905 = vmul.u32 %v904, 10
  %v906 = vsub.s32 %v900, %v905
  %v907 = vsub.s32 0, %v906
  %v908 = vsel %vm898, %v907, %v906
  %vm909 = vcmp.lt.s32.totalorder %v699, 0
  %v910 = vsub.s32 0, %v699
  %v911 = vsel %vm909, %v910, %v699
  %v912 = vmul.u32.u64.compose %v911, 3435973837
  %v913 = vextract.low.u32 %v912
  %v914 = vextract.high.u32 %v912
  %v915 = vshrl.u32 %v914, 3
  %v916 = vmul.u32 %v915, 10
  %v917 = vsub.s32 %v911, %v916
  %v918 = vsub.s32 0, %v917
  %v919 = vsel %vm909, %v918, %v917
  %vm920 = vcmp.ne.s32.totalorder %v710, 0
  %vm921 = vcmp.ne.s32.totalorder %v721, 0
  %vm922 = vcmp.ne.s32.totalorder %v732, 0
  %vm923 = vcmp.ne.s32.totalorder %v743, 0
  %vm924 = vcmp.ne.s32.totalorder %v754, 0
  %vm925 = vcmp.ne.s32.totalorder %v765, 0
  %vm926 = vcmp.ne.s32.totalorder %v776, 0
  %vm927 = vcmp.ne.s32.totalorder %v787, 0
  %vm928 = vcmp.ne.s32.totalorder %v798, 0
  %vm929 = vcmp.ne.s32.totalorder %v809, 0
  %vm930 = vcmp.ne.s32.totalorder %v820, 0
  %vm931 = vcmp.ne.s32.totalorder %v831, 0
  %vm932 = vcmp.ne.s32.totalorder %v842, 0
  %vm933 = vcmp.ne.s32.totalorder %v853, 0
  %vm934 = vcmp.ne.s32.totalorder %v864, 0
  %vm935 = vcmp.ne.s32.totalorder %v875, 0
  %vm936 = vcmp.ne.s32.totalorder %v886, 0
  %vm937 = vcmp.ne.s32.totalorder %v897, 0
  %vm938 = vcmp.ne.s32.totalorder %v908, 0
  %vm939 = vcmp.ne.s32.totalorder %v919, 0
  %vm940 = vcmp.lt.s32.totalorder %v710, 0
  %vm941 = vcmp.lt.s32.totalorder %v721, 0
  %vm942 = vcmp.lt.s32.totalorder %v732, 0
  %vm943 = vcmp.lt.s32.totalorder %v743, 0
  %vm944 = vcmp.lt.s32.totalorder %v754, 0
  %vm945 = vcmp.lt.s32.totalorder %v765, 0
  %vm946 = vcmp.lt.s32.totalorder %v776, 0
  %vm947 = vcmp.lt.s32.totalorder %v787, 0
  %vm948 = vcmp.lt.s32.totalorder %v798, 0
  %vm949 = vcmp.lt.s32.totalorder %v809, 0
  %vm950 = vcmp.lt.s32.totalorder %v820, 0
  %vm951 = vcmp.lt.s32.totalorder %v831, 0
  %vm952 = vcmp.lt.s32.totalorder %v842, 0
  %vm953 = vcmp.lt.s32.totalorder %v853, 0
  %vm954 = vcmp.lt.s32.totalorder %v864, 0
  %vm955 = vcmp.lt.s32.totalorder %v875, 0
  %vm956 = vcmp.lt.s32.totalorder %v886, 0
  %vm957 = vcmp.lt.s32.totalorder %v897, 0
  %vm958 = vcmp.lt.s32.totalorder %v908, 0
  %vm959 = vcmp.lt.s32.totalorder %v919, 0
  %vm960 = vmand %vm940, %vm920
  %vm961 = vmand %vm941, %vm921
  %vm962 = vmand %vm942, %vm922
  %vm963 = vmand %vm943, %vm923
  %vm964 = vmand %vm944, %vm924
  %vm965 = vmand %vm945, %vm925
  %vm966 = vmand %vm946, %vm926
  %vm967 = vmand %vm947, %vm927
  %vm968 = vmand %vm948, %vm928
  %vm969 = vmand %vm949, %vm929
  %vm970 = vmand %vm950, %vm930
  %vm971 = vmand %vm951, %vm931
  %vm972 = vmand %vm952, %vm932
  %vm973 = vmand %vm953, %vm933
  %vm974 = vmand %vm954, %vm934
  %vm975 = vmand %vm955, %vm935
  %vm976 = vmand %vm956, %vm936
  %vm977 = vmand %vm957, %vm937
  %vm978 = vmand %vm958, %vm938
  %vm979 = vmand %vm959, %vm939
  %v980 = vadd.s32 %v710, 10
  %v981 = vadd.s32 %v721, 10
  %v982 = vadd.s32 %v732, 10
  %v983 = vadd.s32 %v743, 10
  %v984 = vadd.s32 %v754, 10
  %v985 = vadd.s32 %v765, 10
  %v986 = vadd.s32 %v776, 10
  %v987 = vadd.s32 %v787, 10
  %v988 = vadd.s32 %v798, 10
  %v989 = vadd.s32 %v809, 10
  %v990 = vadd.s32 %v820, 10
  %v991 = vadd.s32 %v831, 10
  %v992 = vadd.s32 %v842, 10
  %v993 = vadd.s32 %v853, 10
  %v994 = vadd.s32 %v864, 10
  %v995 = vadd.s32 %v875, 10
  %v996 = vadd.s32 %v886, 10
  %v997 = vadd.s32 %v897, 10
  %v998 = vadd.s32 %v908, 10
  %v999 = vadd.s32 %v919, 10
  %v1000 = vsel %vm960, %v980, %v710
  %v1001 = vsel %vm961, %v981, %v721
  %v1002 = vsel %vm962, %v982, %v732
  %v1003 = vsel %vm963, %v983, %v743
  %v1004 = vsel %vm964, %v984, %v754
  %v1005 = vsel %vm965, %v985, %v765
  %v1006 = vsel %vm966, %v986, %v776
  %v1007 = vsel %vm967, %v987, %v787
  %v1008 = vsel %vm968, %v988, %v798
  %v1009 = vsel %vm969, %v989, %v809
  %v1010 = vsel %vm970, %v990, %v820
  %v1011 = vsel %vm971, %v991, %v831
  %v1012 = vsel %vm972, %v992, %v842
  %v1013 = vsel %vm973, %v993, %v853
  %v1014 = vsel %vm974, %v994, %v864
  %v1015 = vsel %vm975, %v995, %v875
  %v1016 = vsel %vm976, %v996, %v886
  %v1017 = vsel %vm977, %v997, %v897
  %v1018 = vsel %vm978, %v998, %v908
  %v1019 = vsel %vm979, %v999, %v919
  %vm1020 = vcmp.lt.s32.totalorder %v1000, 8
  %vm1021 = vcmp.lt.s32.totalorder %v1001, 8
  %vm1022 = vcmp.lt.s32.totalorder %v1002, 8
  %vm1023 = vcmp.lt.s32.totalorder %v1003, 8
  %vm1024 = vcmp.lt.s32.totalorder %v1004, 8
  %vm1025 = vcmp.lt.s32.totalorder %v1005, 8
  %vm1026 = vcmp.lt.s32.totalorder %v1006, 8
  %vm1027 = vcmp.lt.s32.totalorder %v1007, 8
  %vm1028 = vcmp.lt.s32.totalorder %v1008, 8
  %vm1029 = vcmp.lt.s32.totalorder %v1009, 8
  %vm1030 = vcmp.lt.s32.totalorder %v1010, 8
  %vm1031 = vcmp.lt.s32.totalorder %v1011, 8
  %vm1032 = vcmp.lt.s32.totalorder %v1012, 8
  %vm1033 = vcmp.lt.s32.totalorder %v1013, 8
  %vm1034 = vcmp.lt.s32.totalorder %v1014, 8
  %vm1035 = vcmp.lt.s32.totalorder %v1015, 8
  %vm1036 = vcmp.lt.s32.totalorder %v1016, 8
  %vm1037 = vcmp.lt.s32.totalorder %v1017, 8
  %vm1038 = vcmp.lt.s32.totalorder %v1018, 8
  %vm1039 = vcmp.lt.s32.totalorder %v1019, 8
  %vm1040 = vcmp.lt.s32.totalorder %v680, 80
  %vm1041 = vcmp.lt.s32.totalorder %v681, 80
  %vm1042 = vcmp.lt.s32.totalorder %v682, 80
  %vm1043 = vcmp.lt.s32.totalorder %v683, 80
  %vm1044 = vcmp.lt.s32.totalorder %v684, 80
  %vm1045 = vcmp.lt.s32.totalorder %v685, 80
  %vm1046 = vcmp.lt.s32.totalorder %v686, 80
  %vm1047 = vcmp.lt.s32.totalorder %v687, 80
  %vm1048 = vcmp.lt.s32.totalorder %v688, 80
  %vm1049 = vcmp.lt.s32.totalorder %v689, 80
  %vm1050 = vcmp.lt.s32.totalorder %v690, 80
  %vm1051 = vcmp.lt.s32.totalorder %v691, 80
  %vm1052 = vcmp.lt.s32.totalorder %v692, 80
  %vm1053 = vcmp.lt.s32.totalorder %v693, 80
  %vm1054 = vcmp.lt.s32.totalorder %v694, 80
  %vm1055 = vcmp.lt.s32.totalorder %v695, 80
  %vm1056 = vcmp.lt.s32.totalorder %v696, 80
  %vm1057 = vcmp.lt.s32.totalorder %v697, 80
  %vm1058 = vcmp.lt.s32.totalorder %v698, 80
  %vm1059 = vcmp.lt.s32.totalorder %v699, 80
  %vm1060 = vmand %vm1020, %vm1040
  %vm1061 = vmand %vm1021, %vm1041
  %vm1062 = vmand %vm1022, %vm1042
  %vm1063 = vmand %vm1023, %vm1043
  %vm1064 = vmand %vm1024, %vm1044
  %vm1065 = vmand %vm1025, %vm1045
  %vm1066 = vmand %vm1026, %vm1046
  %vm1067 = vmand %vm1027, %vm1047
  %vm1068 = vmand %vm1028, %vm1048
  %vm1069 = vmand %vm1029, %vm1049
  %vm1070 = vmand %vm1030, %vm1050
  %vm1071 = vmand %vm1031, %vm1051
  %vm1072 = vmand %vm1032, %vm1052
  %vm1073 = vmand %vm1033, %vm1053
  %vm1074 = vmand %vm1034, %vm1054
  %vm1075 = vmand %vm1035, %vm1055
  %vm1076 = vmand %vm1036, %vm1056
  %vm1077 = vmand %vm1037, %vm1057
  %vm1078 = vmand %vm1038, %vm1058
  %vm1079 = vmand %vm1039, %vm1059
  %v1080 = vsel %vm1060, %v339, 0.0
  %v1081 = vsel %vm1061, %v340, 0.0
  %v1082 = vsel %vm1062, %v341, 0.0
  %v1083 = vsel %vm1063, %v342, 0.0
  %v1084 = vsel %vm1064, %v343, 0.0
  %v1085 = vsel %vm1065, %v344, 0.0
  %v1086 = vsel %vm1066, %v345, 0.0
  %v1087 = vsel %vm1067, %v346, 0.0
  %v1088 = vsel %vm1068, %v347, 0.0
  %v1089 = vsel %vm1069, %v348, 0.0
  %v1090 = vsel %vm1070, %v349, 0.0
  %v1091 = vsel %vm1071, %v350, 0.0
  %v1092 = vsel %vm1072, %v351, 0.0
  %v1093 = vsel %vm1073, %v352, 0.0
  %v1094 = vsel %vm1074, %v353, 0.0
  %v1095 = vsel %vm1075, %v354, 0.0
  %v1096 = vsel %vm1076, %v355, 0.0
  %v1097 = vsel %vm1077, %v356, 0.0
  %v1098 = vsel %vm1078, %v357, 0.0
  %v1099 = vsel %vm1079, %v358, 0.0
  %v1100 = vpack.c.bf16 %v1081, %v1080
  %v1101 = vpack.c.bf16 %v1083, %v1082
  %v1102 = vpack.c.bf16 %v1085, %v1084
  %v1103 = vpack.c.bf16 %v1087, %v1086
  %v1104 = vpack.c.bf16 %v1089, %v1088
  %v1105 = vpack.c.bf16 %v1091, %v1090
  %v1106 = vpack.c.bf16 %v1093, %v1092
  %v1107 = vpack.c.bf16 %v1095, %v1094
  %v1108 = vpack.c.bf16 %v1097, %v1096
  %v1109 = vpack.c.bf16 %v1099, %v1098
  %vm1110 = vcmask 291840
  %vm1111 = vsmask.f32 5376
  %vm1112 = vmand %vm1110, %vm1111
  %v1113 = vld [vmem:[#allocation2] sm:$0x3f]
  %v1114 = vsel %vm1112, 0, %v1113
  %1115 = vst [vmem:[#allocation2] sm:$0x3f] %v1114
  %vm1116 = vcmask 293890
  %vm1117 = vsmask.f32 7946
  %vm1118 = vmand %vm1116, %vm1117
  %v1119 = vld [vmem:[#allocation2 + $0x20] sm:$0xfc]
  %v1120 = vsel %vm1118, 0, %v1119
  %1121 = vst [vmem:[#allocation2 + $0x20] sm:$0xfc] %v1120
  %v1123 = vshrl.u32 %v1100, 16
  %v1125 = vrot.slane %v1123, 2
  %v1126 = vshll.u32 %v1100, 16
  %v1128 = vrot.slane %v1126, 3
  %v1129 = vor.u32 %v1125, %v1128
  %v1131 = vshrl.u32 %v1101, 16
  %v1133 = vrot.slane %v1131, 2
  %v1134 = vshll.u32 %v1101, 16
  %v1136 = vrot.slane %v1134, 3
  %v1137 = vor.u32 %v1133, %v1136
  %v1138 = vsel %vm1111, %v1129, %v1137
  %v1140 = vshrl.u32 %v1102, 16
  %v1142 = vrot.slane %v1140, 2
  %v1143 = vshll.u32 %v1102, 16
  %v1145 = vrot.slane %v1143, 3
  %v1146 = vor.u32 %v1142, %v1145
  %v1147 = vsel %vm1111, %v1137, %v1146
  %v1149 = vshrl.u32 %v1103, 16
  %v1151 = vrot.slane %v1149, 2
  %v1152 = vshll.u32 %v1103, 16
  %v1154 = vrot.slane %v1152, 3
  %v1155 = vor.u32 %v1151, %v1154
  %v1156 = vsel %vm1111, %v1146, %v1155
  %v1158 = vshrl.u32 %v1104, 16
  %v1160 = vrot.slane %v1158, 2
  %v1161 = vshll.u32 %v1104, 16
  %v1163 = vrot.slane %v1161, 3
  %v1164 = vor.u32 %v1160, %v1163
  %v1165 = vsel %vm1111, %v1155, %v1164
  %vm1171 = vcmask 31749
  %vm1172 = vsmask.f32 7958
  %vm1173 = vmand %vm1171, %vm1172
  %v1174 = vld [vmem:[#allocation2] sm:$0xe0]
  %v1175 = vsel %vm1173, %v1129, %v1174
  %1176 = vst [vmem:[#allocation2] sm:$0xe0] %v1175
  %vm1177 = vcmask 31744
  %1178 = vst.msk [vmem:[#allocation2 + $0x8] sm:$0xff] %vm1177, %v1138
  %1179 = vst.msk [vmem:[#allocation2 + $0x10] sm:$0xff] %vm1177, %v1147
  %1180 = vst.msk [vmem:[#allocation2 + $0x18] sm:$0xff] %vm1177, %v1156
  %1181 = vst.msk [vmem:[#allocation2 + $0x20] sm:$0xff] %vm1177, %v1165
  %vm1187 = vcmask 1044480
  %v1188 = vrot.slane %v1100, 3
  %v1189 = vrot.slane %v1101, 3
  %v1190 = vsel %vm1187, %v1188, %v1189
  %v1191 = vrot.slane %v1102, 3
  %v1192 = vsel %vm1187, %v1189, %v1191
  %v1193 = vrot.slane %v1103, 3
  %v1194 = vsel %vm1187, %v1191, %v1193
  %v1195 = vrot.slane %v1104, 3
  %v1196 = vsel %vm1187, %v1193, %v1195
  %1197 = vrot.lane.b32.xlu0 %v1188, 4
  %v1198 = vpop.permute.xlu0 %1197
  %1199 = vrot.lane.b32.xlu0 %v1190, 4
  %v1200 = vpop.permute.xlu0 %1199
  %1201 = vrot.lane.b32.xlu0 %v1192, 4
  %v1202 = vpop.permute.xlu0 %1201
  %1203 = vrot.lane.b32.xlu0 %v1194, 4
  %v1204 = vpop.permute.xlu0 %1203
  %1205 = vrot.lane.b32.xlu0 %v1196, 4
  %v1206 = vpop.permute.xlu0 %1205
  %vm1212 = vcmask 64549
  %1213 = vst.msk [vmem:[#allocation2] sm:$0xe0] %vm1212, %v1198
  %vm1214 = vcmask 64544
  %1215 = vst.msk [vmem:[#allocation2 + $0x8] sm:$0xff] %vm1214, %v1200
  %1216 = vst.msk [vmem:[#allocation2 + $0x10] sm:$0xff] %vm1214, %v1202
  %1217 = vst.msk [vmem:[#allocation2 + $0x18] sm:$0xff] %vm1214, %v1204
  %1218 = vst.msk [vmem:[#allocation2 + $0x20] sm:$0xff] %vm1214, %v1206
  %vm1219 = vsmask.f32 4352
  %v1220 = vrot.slane %v1123, 3
  %v1221 = vrot.slane %v1126, 4
  %v1222 = vor.u32 %v1220, %v1221
  %v1223 = vrot.slane %v1131, 3
  %v1224 = vrot.slane %v1134, 4
  %v1225 = vor.u32 %v1223, %v1224
  %v1226 = vsel %vm1219, %v1222, %v1225
  %v1227 = vrot.slane %v1140, 3
  %v1228 = vrot.slane %v1143, 4
  %v1229 = vor.u32 %v1227, %v1228
  %v1230 = vsel %vm1219, %v1225, %v1229
  %v1231 = vrot.slane %v1149, 3
  %v1232 = vrot.slane %v1152, 4
  %v1233 = vor.u32 %v1231, %v1232
  %v1234 = vsel %vm1219, %v1229, %v1233
  %v1235 = vrot.slane %v1158, 3
  %v1236 = vrot.slane %v1161, 4
  %v1237 = vor.u32 %v1235, %v1236
  %v1238 = vsel %vm1219, %v1233, %v1237
  %1239 = vrot.lane.b32.xlu0 %v1222, 8
  %v1240 = vpop.permute.xlu0 %1239
  %1241 = vrot.lane.b32.xlu0 %v1226, 8
  %v1242 = vpop.permute.xlu0 %1241
  %1243 = vrot.lane.b32.xlu0 %v1230, 8
  %v1244 = vpop.permute.xlu0 %1243
  %1245 = vrot.lane.b32.xlu0 %v1234, 8
  %v1246 = vpop.permute.xlu0 %1245
  %1247 = vrot.lane.b32.xlu0 %v1238, 8
  %v1248 = vpop.permute.xlu0 %1247
  %vm1254 = vcmask 97348
  %vm1255 = vsmask.f32 7954
  %vm1256 = vmand %vm1254, %vm1255
  %v1257 = vld [vmem:[#allocation2] sm:$0xf0]
  %v1258 = vsel %vm1256, %v1240, %v1257
  %1259 = vst [vmem:[#allocation2] sm:$0xf0] %v1258
  %vm1260 = vcmask 97344
  %1261 = vst.msk [vmem:[#allocation2 + $0x8] sm:$0xff] %vm1260, %v1242
  %1262 = vst.msk [vmem:[#allocation2 + $0x10] sm:$0xff] %vm1260, %v1244
  %1263 = vst.msk [vmem:[#allocation2 + $0x18] sm:$0xff] %vm1260, %v1246
  %1264 = vst.msk [vmem:[#allocation2 + $0x20] sm:$0xff] %vm1260, %v1248
  %vm1265 = vsmask.f32 256
  %v1266 = vrot.slane %v1123, 7
  %v1267 = vor.u32 %v1266, %v1126
  %v1268 = vrot.slane %v1131, 7
  %v1269 = vor.u32 %v1268, %v1134
  %v1270 = vsel %vm1265, %v1266, %v1269
  %v1271 = vrot.slane %v1140, 7
  %v1272 = vor.u32 %v1271, %v1143
  %v1273 = vsel %vm1265, %v1268, %v1272
  %v1274 = vrot.slane %v1149, 7
  %v1275 = vor.u32 %v1274, %v1152
  %v1276 = vsel %vm1265, %v1271, %v1275
  %v1277 = vrot.slane %v1158, 7
  %v1278 = vor.u32 %v1277, %v1161
  %v1279 = vsel %vm1265, %v1274, %v1278
  %1280 = vrot.lane.b32.xlu0 %v1267, 12
  %v1281 = vpop.permute.xlu0 %1280
  %1282 = vrot.lane.b32.xlu0 %v1270, 12
  %v1283 = vpop.permute.xlu0 %1282
  %1284 = vrot.lane.b32.xlu0 %v1273, 12
  %v1285 = vpop.permute.xlu0 %1284
  %1286 = vrot.lane.b32.xlu0 %v1276, 12
  %v1287 = vpop.permute.xlu0 %1286
  %1288 = vrot.lane.b32.xlu0 %v1279, 12
  %v1289 = vpop.permute.xlu0 %1288
  %vm1295 = vcmask 130144
  %vm1296 = vsmask.f32 7938
  %vm1297 = vmand %vm1295, %vm1296
  %v1298 = vld [vmem:[#allocation2] sm:$0xff]
  %v1299 = vsel %vm1297, %v1281, %v1298
  %1300 = vst [vmem:[#allocation2] sm:$0xff] %v1299
  %vm1301 = vcmask 130144
  %1302 = vst.msk [vmem:[#allocation2 + $0x8] sm:$0xff] %vm1301, %v1283
  %1303 = vst.msk [vmem:[#allocation2 + $0x10] sm:$0xff] %vm1301, %v1285
  %1304 = vst.msk [vmem:[#allocation2 + $0x18] sm:$0xff] %vm1301, %v1287
  %1305 = vst.msk [vmem:[#allocation2 + $0x20] sm:$0xff] %vm1301, %v1289
  %1306 = vrot.lane.b32.xlu0 %v1100, 16
  %v1307 = vpop.permute.xlu0 %1306
  %1308 = vrot.lane.b32.xlu0 %v1101, 16
  %v1309 = vpop.permute.xlu0 %1308
  %1310 = vrot.lane.b32.xlu0 %v1102, 16
  %v1311 = vpop.permute.xlu0 %1310
  %1312 = vrot.lane.b32.xlu0 %v1103, 16
  %v1313 = vpop.permute.xlu0 %1312
  %1314 = vrot.lane.b32.xlu0 %v1104, 16
  %v1315 = vpop.permute.xlu0 %1314
  %vm1321 = vcmask 162944
  %1322 = vst.msk [vmem:[#allocation2] sm:$0xff] %vm1321, %v1307
  %1323 = vst.msk [vmem:[#allocation2 + $0x8] sm:$0xff] %vm1321, %v1309
  %1324 = vst.msk [vmem:[#allocation2 + $0x10] sm:$0xff] %vm1321, %v1311
  %1325 = vst.msk [vmem:[#allocation2 + $0x18] sm:$0xff] %vm1321, %v1313
  %1326 = vst.msk [vmem:[#allocation2 + $0x20] sm:$0xff] %vm1321, %v1315
  %vm1327 = vsmask.f32 7424
  %v1328 = vrot.slane %v1126, 1
  %v1329 = vor.u32 %v1123, %v1328
  %v1330 = vrot.slane %v1134, 1
  %v1331 = vsel %vm1327, %v1329, %v1330
  %v1332 = vor.u32 %v1131, %v1330
  %v1333 = vrot.slane %v1143, 1
  %v1334 = vsel %vm1327, %v1332, %v1333
  %v1335 = vor.u32 %v1140, %v1333
  %v1336 = vrot.slane %v1152, 1
  %v1337 = vsel %vm1327, %v1335, %v1336
  %v1338 = vor.u32 %v1149, %v1336
  %v1339 = vrot.slane %v1161, 1
  %v1340 = vsel %vm1327, %v1338, %v1339
  %v1341 = vor.u32 %v1158, %v1339
  %1342 = vrot.lane.b32.xlu0 %v1331, 20
  %v1343 = vpop.permute.xlu0 %1342
  %1344 = vrot.lane.b32.xlu0 %v1334, 20
  %v1345 = vpop.permute.xlu0 %1344
  %1346 = vrot.lane.b32.xlu0 %v1337, 20
  %v1347 = vpop.permute.xlu0 %1346
  %1348 = vrot.lane.b32.xlu0 %v1340, 20
  %v1349 = vpop.permute.xlu0 %1348
  %1350 = vrot.lane.b32.xlu0 %v1341, 20
  %v1351 = vpop.permute.xlu0 %1350
  %vm1357 = vcmask 195744
  %1358 = vst.msk [vmem:[#allocation2] sm:$0xff] %vm1357, %v1343
  %1359 = vst.msk [vmem:[#allocation2 + $0x8] sm:$0xff] %vm1357, %v1345
  %1360 = vst.msk [vmem:[#allocation2 + $0x10] sm:$0xff] %vm1357, %v1347
  %1361 = vst.msk [vmem:[#allocation2 + $0x18] sm:$0xff] %vm1357, %v1349
  %vm1362 = vcmask 195744
  %vm1363 = vmand %vm1362, %vm1327
  %v1364 = vld [vmem:[#allocation2 + $0x20] sm:$0xff]
  %v1365 = vsel %vm1363, %v1351, %v1364
  %1366 = vst [vmem:[#allocation2 + $0x20] sm:$0xff] %v1365
  %vm1367 = vsmask.f32 3328
  %v1368 = vrot.slane %v1123, 4
  %v1369 = vrot.slane %v1126, 5
  %v1370 = vor.u32 %v1368, %v1369
  %v1371 = vrot.slane %v1131, 4
  %v1372 = vrot.slane %v1134, 5
  %v1373 = vor.u32 %v1371, %v1372
  %v1374 = vsel %vm1367, %v1370, %v1373
  %v1375 = vrot.slane %v1140, 4
  %v1376 = vrot.slane %v1143, 5
  %v1377 = vor.u32 %v1375, %v1376
  %v1378 = vsel %vm1367, %v1373, %v1377
  %v1379 = vrot.slane %v1149, 4
  %v1380 = vrot.slane %v1152, 5
  %v1381 = vor.u32 %v1379, %v1380
  %v1382 = vsel %vm1367, %v1377, %v1381
  %v1383 = vrot.slane %v1158, 4
  %v1384 = vrot.slane %v1161, 5
  %v1385 = vor.u32 %v1383, %v1384
  %v1386 = vsel %vm1367, %v1381, %v1385
  %1387 = vrot.lane.b32.xlu0 %v1374, 24
  %v1388 = vpop.permute.xlu0 %1387
  %1389 = vrot.lane.b32.xlu0 %v1378, 24
  %v1390 = vpop.permute.xlu0 %1389
  %1391 = vrot.lane.b32.xlu0 %v1382, 24
  %v1392 = vpop.permute.xlu0 %1391
  %1393 = vrot.lane.b32.xlu0 %v1386, 24
  %v1394 = vpop.permute.xlu0 %1393
  %1395 = vrot.lane.b32.xlu0 %v1385, 24
  %v1396 = vpop.permute.xlu0 %1395
  %vm1402 = vcmask 228544
  %1403 = vst.msk [vmem:[#allocation2] sm:$0xff] %vm1402, %v1388
  %1404 = vst.msk [vmem:[#allocation2 + $0x8] sm:$0xff] %vm1402, %v1390
  %1405 = vst.msk [vmem:[#allocation2 + $0x10] sm:$0xff] %vm1402, %v1392
  %1406 = vst.msk [vmem:[#allocation2 + $0x18] sm:$0xff] %vm1402, %v1394
  %vm1407 = vcmask 224448
  %vm1408 = vmand %vm1407, %vm1367
  %v1409 = vld [vmem:[#allocation2 + $0x20] sm:$0xf]
  %v1410 = vsel %vm1408, %v1396, %v1409
  %1411 = vst [vmem:[#allocation2 + $0x20] sm:$0xf] %v1410
  %vm1412 = vcmask 1042432
  %v1413 = vrot.slane %v1100, 5
  %v1414 = vrot.slane %v1101, 5
  %v1415 = vsel %vm1412, %v1413, %v1414
  %v1416 = vrot.slane %v1102, 5
  %v1417 = vsel %vm1412, %v1414, %v1416
  %v1418 = vrot.slane %v1103, 5
  %v1419 = vsel %vm1412, %v1416, %v1418
  %v1420 = vrot.slane %v1104, 5
  %v1421 = vsel %vm1412, %v1418, %v1420
  %1422 = vrot.lane.b32.xlu0 %v1415, 28
  %v1423 = vpop.permute.xlu0 %1422
  %1424 = vrot.lane.b32.xlu0 %v1417, 28
  %v1425 = vpop.permute.xlu0 %1424
  %1426 = vrot.lane.b32.xlu0 %v1419, 28
  %v1427 = vpop.permute.xlu0 %1426
  %1428 = vrot.lane.b32.xlu0 %v1421, 28
  %v1429 = vpop.permute.xlu0 %1428
  %1430 = vrot.lane.b32.xlu0 %v1420, 28
  %v1431 = vpop.permute.xlu0 %1430
  %vm1437 = vcmask 261344
  %1438 = vst.msk [vmem:[#allocation2] sm:$0xff] %vm1437, %v1423
  %1439 = vst.msk [vmem:[#allocation2 + $0x8] sm:$0xff] %vm1437, %v1425
  %1440 = vst.msk [vmem:[#allocation2 + $0x10] sm:$0xff] %vm1437, %v1427
  %1441 = vst.msk [vmem:[#allocation2 + $0x18] sm:$0xff] %vm1437, %v1429
  %vm1442 = vcmask 256224
  %1443 = vst.msk [vmem:[#allocation2 + $0x20] sm:$0x7] %vm1442, %v1431
  %vm1444 = vsmask.f32 2304
  %v1445 = vrot.slane %v1123, 5
  %v1446 = vrot.slane %v1126, 6
  %v1447 = vor.u32 %v1445, %v1446
  %v1448 = vrot.slane %v1131, 5
  %v1449 = vrot.slane %v1134, 6
  %v1450 = vor.u32 %v1448, %v1449
  %v1451 = vsel %vm1444, %v1447, %v1450
  %v1452 = vrot.slane %v1140, 5
  %v1453 = vrot.slane %v1143, 6
  %v1454 = vor.u32 %v1452, %v1453
  %v1455 = vsel %vm1444, %v1450, %v1454
  %v1456 = vrot.slane %v1149, 5
  %v1457 = vrot.slane %v1152, 6
  %v1458 = vor.u32 %v1456, %v1457
  %v1459 = vsel %vm1444, %v1454, %v1458
  %v1460 = vrot.slane %v1158, 5
  %v1461 = vrot.slane %v1161, 6
  %v1462 = vor.u32 %v1460, %v1461
  %v1463 = vsel %vm1444, %v1458, %v1462
  %1464 = vrot.lane.b32.xlu0 %v1451, 32
  %v1465 = vpop.permute.xlu0 %1464
  %1466 = vrot.lane.b32.xlu0 %v1455, 32
  %v1467 = vpop.permute.xlu0 %1466
  %1468 = vrot.lane.b32.xlu0 %v1459, 32
  %v1469 = vpop.permute.xlu0 %1468
  %1470 = vrot.lane.b32.xlu0 %v1463, 32
  %v1471 = vpop.permute.xlu0 %1470
  %1472 = vrot.lane.b32.xlu0 %v1462, 32
  %v1473 = vpop.permute.xlu0 %1472
  %vm1479 = vcmask 294144
  %1480 = vst.msk [vmem:[#allocation2] sm:$0xff] %vm1479, %v1465
  %1481 = vst.msk [vmem:[#allocation2 + $0x8] sm:$0xff] %vm1479, %v1467
  %1482 = vst.msk [vmem:[#allocation2 + $0x10] sm:$0xff] %vm1479, %v1469
  %1483 = vst.msk [vmem:[#allocation2 + $0x18] sm:$0xff] %vm1479, %v1471
  %vm1484 = vcmask 289024
  %vm1485 = vmand %vm1484, %vm1444
  %v1486 = vld [vmem:[#allocation2 + $0x20] sm:$0x7]
  %v1487 = vsel %vm1485, %v1473, %v1486
  %1488 = vst [vmem:[#allocation2 + $0x20] sm:$0x7] %v1487
  %v1489 = vld [vmem:[#allocation2 + $0x28] sm:$0x3f]
  %v1490 = vsel %vm1112, 0, %v1489
  %1491 = vst [vmem:[#allocation2 + $0x28] sm:$0x3f] %v1490
  %v1492 = vld [vmem:[#allocation2 + $0x48] sm:$0xfc]
  %v1493 = vsel %vm1118, 0, %v1492
  %1494 = vst [vmem:[#allocation2 + $0x48] sm:$0xfc] %v1493
  %v1496 = vshrl.u32 %v1105, 16
  %v1498 = vrot.slane %v1496, 2
  %v1499 = vshll.u32 %v1105, 16
  %v1501 = vrot.slane %v1499, 3
  %v1502 = vor.u32 %v1498, %v1501
  %v1504 = vshrl.u32 %v1106, 16
  %v1506 = vrot.slane %v1504, 2
  %v1507 = vshll.u32 %v1106, 16
  %v1509 = vrot.slane %v1507, 3
  %v1510 = vor.u32 %v1506, %v1509
  %v1511 = vsel %vm1111, %v1502, %v1510
  %v1513 = vshrl.u32 %v1107, 16
  %v1515 = vrot.slane %v1513, 2
  %v1516 = vshll.u32 %v1107, 16
  %v1518 = vrot.slane %v1516, 3
  %v1519 = vor.u32 %v1515, %v1518
  %v1520 = vsel %vm1111, %v1510, %v1519
  %v1522 = vshrl.u32 %v1108, 16
  %v1524 = vrot.slane %v1522, 2
  %v1525 = vshll.u32 %v1108, 16
  %v1527 = vrot.slane %v1525, 3
  %v1528 = vor.u32 %v1524, %v1527
  %v1529 = vsel %vm1111, %v1519, %v1528
  %v1531 = vshrl.u32 %v1109, 16
  %v1533 = vrot.slane %v1531, 2
  %v1534 = vshll.u32 %v1109, 16
  %v1536 = vrot.slane %v1534, 3
  %v1537 = vor.u32 %v1533, %v1536
  %v1538 = vsel %vm1111, %v1528, %v1537
  %v1544 = vld [vmem:[#allocation2 + $0x28] sm:$0xe0]
  %v1545 = vsel %vm1173, %v1502, %v1544
  %1546 = vst [vmem:[#allocation2 + $0x28] sm:$0xe0] %v1545
  %1547 = vst.msk [vmem:[#allocation2 + $0x30] sm:$0xff] %vm1177, %v1511
  %1548 = vst.msk [vmem:[#allocation2 + $0x38] sm:$0xff] %vm1177, %v1520
  %1549 = vst.msk [vmem:[#allocation2 + $0x40] sm:$0xff] %vm1177, %v1529
  %1550 = vst.msk [vmem:[#allocation2 + $0x48] sm:$0xff] %vm1177, %v1538
  %v1556 = vrot.slane %v1105, 3
  %v1557 = vrot.slane %v1106, 3
  %v1558 = vsel %vm1187, %v1556, %v1557
  %v1559 = vrot.slane %v1107, 3
  %v1560 = vsel %vm1187, %v1557, %v1559
  %v1561 = vrot.slane %v1108, 3
  %v1562 = vsel %vm1187, %v1559, %v1561
  %v1563 = vrot.slane %v1109, 3
  %v1564 = vsel %vm1187, %v1561, %v1563
  %1565 = vrot.lane.b32.xlu0 %v1556, 4
  %v1566 = vpop.permute.xlu0 %1565
  %1567 = vrot.lane.b32.xlu0 %v1558, 4
  %v1568 = vpop.permute.xlu0 %1567
  %1569 = vrot.lane.b32.xlu0 %v1560, 4
  %v1570 = vpop.permute.xlu0 %1569
  %1571 = vrot.lane.b32.xlu0 %v1562, 4
  %v1572 = vpop.permute.xlu0 %1571
  %1573 = vrot.lane.b32.xlu0 %v1564, 4
  %v1574 = vpop.permute.xlu0 %1573
  %1580 = vst.msk [vmem:[#allocation2 + $0x28] sm:$0xe0] %vm1212, %v1566
  %1581 = vst.msk [vmem:[#allocation2 + $0x30] sm:$0xff] %vm1214, %v1568
  %1582 = vst.msk [vmem:[#allocation2 + $0x38] sm:$0xff] %vm1214, %v1570
  %1583 = vst.msk [vmem:[#allocation2 + $0x40] sm:$0xff] %vm1214, %v1572
  %1584 = vst.msk [vmem:[#allocation2 + $0x48] sm:$0xff] %vm1214, %v1574
  %v1585 = vrot.slane %v1496, 3
  %v1586 = vrot.slane %v1499, 4
  %v1587 = vor.u32 %v1585, %v1586
  %v1588 = vrot.slane %v1504, 3
  %v1589 = vrot.slane %v1507, 4
  %v1590 = vor.u32 %v1588, %v1589
  %v1591 = vsel %vm1219, %v1587, %v1590
  %v1592 = vrot.slane %v1513, 3
  %v1593 = vrot.slane %v1516, 4
  %v1594 = vor.u32 %v1592, %v1593
  %v1595 = vsel %vm1219, %v1590, %v1594
  %v1596 = vrot.slane %v1522, 3
  %v1597 = vrot.slane %v1525, 4
  %v1598 = vor.u32 %v1596, %v1597
  %v1599 = vsel %vm1219, %v1594, %v1598
  %v1600 = vrot.slane %v1531, 3
  %v1601 = vrot.slane %v1534, 4
  %v1602 = vor.u32 %v1600, %v1601
  %v1603 = vsel %vm1219, %v1598, %v1602
  %1604 = vrot.lane.b32.xlu0 %v1587, 8
  %v1605 = vpop.permute.xlu0 %1604
  %1606 = vrot.lane.b32.xlu0 %v1591, 8
  %v1607 = vpop.permute.xlu0 %1606
  %1608 = vrot.lane.b32.xlu0 %v1595, 8
  %v1609 = vpop.permute.xlu0 %1608
  %1610 = vrot.lane.b32.xlu0 %v1599, 8
  %v1611 = vpop.permute.xlu0 %1610
  %1612 = vrot.lane.b32.xlu0 %v1603, 8
  %v1613 = vpop.permute.xlu0 %1612
  %v1619 = vld [vmem:[#allocation2 + $0x28] sm:$0xf0]
  %v1620 = vsel %vm1256, %v1605, %v1619
  %1621 = vst [vmem:[#allocation2 + $0x28] sm:$0xf0] %v1620
  %1622 = vst.msk [vmem:[#allocation2 + $0x30] sm:$0xff] %vm1260, %v1607
  %1623 = vst.msk [vmem:[#allocation2 + $0x38] sm:$0xff] %vm1260, %v1609
  %1624 = vst.msk [vmem:[#allocation2 + $0x40] sm:$0xff] %vm1260, %v1611
  %1625 = vst.msk [vmem:[#allocation2 + $0x48] sm:$0xff] %vm1260, %v1613
  %v1626 = vrot.slane %v1496, 7
  %v1627 = vor.u32 %v1626, %v1499
  %v1628 = vrot.slane %v1504, 7
  %v1629 = vor.u32 %v1628, %v1507
  %v1630 = vsel %vm1265, %v1626, %v1629
  %v1631 = vrot.slane %v1513, 7
  %v1632 = vor.u32 %v1631, %v1516
  %v1633 = vsel %vm1265, %v1628, %v1632
  %v1634 = vrot.slane %v1522, 7
  %v1635 = vor.u32 %v1634, %v1525
  %v1636 = vsel %vm1265, %v1631, %v1635
  %v1637 = vrot.slane %v1531, 7
  %v1638 = vor.u32 %v1637, %v1534
  %v1639 = vsel %vm1265, %v1634, %v1638
  %1640 = vrot.lane.b32.xlu0 %v1627, 12
  %v1641 = vpop.permute.xlu0 %1640
  %1642 = vrot.lane.b32.xlu0 %v1630, 12
  %v1643 = vpop.permute.xlu0 %1642
  %1644 = vrot.lane.b32.xlu0 %v1633, 12
  %v1645 = vpop.permute.xlu0 %1644
  %1646 = vrot.lane.b32.xlu0 %v1636, 12
  %v1647 = vpop.permute.xlu0 %1646
  %1648 = vrot.lane.b32.xlu0 %v1639, 12
  %v1649 = vpop.permute.xlu0 %1648
  %v1655 = vld [vmem:[#allocation2 + $0x28] sm:$0xff]
  %v1656 = vsel %vm1297, %v1641, %v1655
  %1657 = vst [vmem:[#allocation2 + $0x28] sm:$0xff] %v1656
  %1658 = vst.msk [vmem:[#allocation2 + $0x30] sm:$0xff] %vm1301, %v1643
  %1659 = vst.msk [vmem:[#allocation2 + $0x38] sm:$0xff] %vm1301, %v1645
  %1660 = vst.msk [vmem:[#allocation2 + $0x40] sm:$0xff] %vm1301, %v1647
  %1661 = vst.msk [vmem:[#allocation2 + $0x48] sm:$0xff] %vm1301, %v1649
  %1662 = vrot.lane.b32.xlu0 %v1105, 16
  %v1663 = vpop.permute.xlu0 %1662
  %1664 = vrot.lane.b32.xlu0 %v1106, 16
  %v1665 = vpop.permute.xlu0 %1664
  %1666 = vrot.lane.b32.xlu0 %v1107, 16
  %v1667 = vpop.permute.xlu0 %1666
  %1668 = vrot.lane.b32.xlu0 %v1108, 16
  %v1669 = vpop.permute.xlu0 %1668
  %1670 = vrot.lane.b32.xlu0 %v1109, 16
  %v1671 = vpop.permute.xlu0 %1670
  %1677 = vst.msk [vmem:[#allocation2 + $0x28] sm:$0xff] %vm1321, %v1663
  %1678 = vst.msk [vmem:[#allocation2 + $0x30] sm:$0xff] %vm1321, %v1665
  %1679 = vst.msk [vmem:[#allocation2 + $0x38] sm:$0xff] %vm1321, %v1667
  %1680 = vst.msk [vmem:[#allocation2 + $0x40] sm:$0xff] %vm1321, %v1669
  %1681 = vst.msk [vmem:[#allocation2 + $0x48] sm:$0xff] %vm1321, %v1671
  %v1682 = vrot.slane %v1499, 1
  %v1683 = vor.u32 %v1496, %v1682
  %v1684 = vrot.slane %v1507, 1
  %v1685 = vsel %vm1327, %v1683, %v1684
  %v1686 = vor.u32 %v1504, %v1684
  %v1687 = vrot.slane %v1516, 1
  %v1688 = vsel %vm1327, %v1686, %v1687
  %v1689 = vor.u32 %v1513, %v1687
  %v1690 = vrot.slane %v1525, 1
  %v1691 = vsel %vm1327, %v1689, %v1690
  %v1692 = vor.u32 %v1522, %v1690
  %v1693 = vrot.slane %v1534, 1
  %v1694 = vsel %vm1327, %v1692, %v1693
  %v1695 = vor.u32 %v1531, %v1693
  %1696 = vrot.lane.b32.xlu0 %v1685, 20
  %v1697 = vpop.permute.xlu0 %1696
  %1698 = vrot.lane.b32.xlu0 %v1688, 20
  %v1699 = vpop.permute.xlu0 %1698
  %1700 = vrot.lane.b32.xlu0 %v1691, 20
  %v1701 = vpop.permute.xlu0 %1700
  %1702 = vrot.lane.b32.xlu0 %v1694, 20
  %v1703 = vpop.permute.xlu0 %1702
  %1704 = vrot.lane.b32.xlu0 %v1695, 20
  %v1705 = vpop.permute.xlu0 %1704
  %1711 = vst.msk [vmem:[#allocation2 + $0x28] sm:$0xff] %vm1357, %v1697
  %1712 = vst.msk [vmem:[#allocation2 + $0x30] sm:$0xff] %vm1357, %v1699
  %1713 = vst.msk [vmem:[#allocation2 + $0x38] sm:$0xff] %vm1357, %v1701
  %1714 = vst.msk [vmem:[#allocation2 + $0x40] sm:$0xff] %vm1357, %v1703
  %v1715 = vld [vmem:[#allocation2 + $0x48] sm:$0xff]
  %v1716 = vsel %vm1363, %v1705, %v1715
  %1717 = vst [vmem:[#allocation2 + $0x48] sm:$0xff] %v1716
  %v1718 = vrot.slane %v1496, 4
  %v1719 = vrot.slane %v1499, 5
  %v1720 = vor.u32 %v1718, %v1719
  %v1721 = vrot.slane %v1504, 4
  %v1722 = vrot.slane %v1507, 5
  %v1723 = vor.u32 %v1721, %v1722
  %v1724 = vsel %vm1367, %v1720, %v1723
  %v1725 = vrot.slane %v1513, 4
  %v1726 = vrot.slane %v1516, 5
  %v1727 = vor.u32 %v1725, %v1726
  %v1728 = vsel %vm1367, %v1723, %v1727
  %v1729 = vrot.slane %v1522, 4
  %v1730 = vrot.slane %v1525, 5
  %v1731 = vor.u32 %v1729, %v1730
  %v1732 = vsel %vm1367, %v1727, %v1731
  %v1733 = vrot.slane %v1531, 4
  %v1734 = vrot.slane %v1534, 5
  %v1735 = vor.u32 %v1733, %v1734
  %v1736 = vsel %vm1367, %v1731, %v1735
  %1737 = vrot.lane.b32.xlu0 %v1724, 24
  %v1738 = vpop.permute.xlu0 %1737
  %1739 = vrot.lane.b32.xlu0 %v1728, 24
  %v1740 = vpop.permute.xlu0 %1739
  %1741 = vrot.lane.b32.xlu0 %v1732, 24
  %v1742 = vpop.permute.xlu0 %1741
  %1743 = vrot.lane.b32.xlu0 %v1736, 24
  %v1744 = vpop.permute.xlu0 %1743
  %1745 = vrot.lane.b32.xlu0 %v1735, 24
  %v1746 = vpop.permute.xlu0 %1745
  %1752 = vst.msk [vmem:[#allocation2 + $0x28] sm:$0xff] %vm1402, %v1738
  %1753 = vst.msk [vmem:[#allocation2 + $0x30] sm:$0xff] %vm1402, %v1740
  %1754 = vst.msk [vmem:[#allocation2 + $0x38] sm:$0xff] %vm1402, %v1742
  %1755 = vst.msk [vmem:[#allocation2 + $0x40] sm:$0xff] %vm1402, %v1744
  %v1756 = vld [vmem:[#allocation2 + $0x48] sm:$0xf]
  %v1757 = vsel %vm1408, %v1746, %v1756
  %1758 = vst [vmem:[#allocation2 + $0x48] sm:$0xf] %v1757
  %v1759 = vrot.slane %v1105, 5
  %v1760 = vrot.slane %v1106, 5
  %v1761 = vsel %vm1412, %v1759, %v1760
  %v1762 = vrot.slane %v1107, 5
  %v1763 = vsel %vm1412, %v1760, %v1762
  %v1764 = vrot.slane %v1108, 5
  %v1765 = vsel %vm1412, %v1762, %v1764
  %v1766 = vrot.slane %v1109, 5
  %v1767 = vsel %vm1412, %v1764, %v1766
  %1768 = vrot.lane.b32.xlu0 %v1761, 28
  %v1769 = vpop.permute.xlu0 %1768
  %1770 = vrot.lane.b32.xlu0 %v1763, 28
  %v1771 = vpop.permute.xlu0 %1770
  %1772 = vrot.lane.b32.xlu0 %v1765, 28
  %v1773 = vpop.permute.xlu0 %1772
  %1774 = vrot.lane.b32.xlu0 %v1767, 28
  %v1775 = vpop.permute.xlu0 %1774
  %1776 = vrot.lane.b32.xlu0 %v1766, 28
  %v1777 = vpop.permute.xlu0 %1776
  %1783 = vst.msk [vmem:[#allocation2 + $0x28] sm:$0xff] %vm1437, %v1769
  %1784 = vst.msk [vmem:[#allocation2 + $0x30] sm:$0xff] %vm1437, %v1771
  %1785 = vst.msk [vmem:[#allocation2 + $0x38] sm:$0xff] %vm1437, %v1773
  %1786 = vst.msk [vmem:[#allocation2 + $0x40] sm:$0xff] %vm1437, %v1775
  %1787 = vst.msk [vmem:[#allocation2 + $0x48] sm:$0x7] %vm1442, %v1777
  %v1788 = vrot.slane %v1496, 5
  %v1789 = vrot.slane %v1499, 6
  %v1790 = vor.u32 %v1788, %v1789
  %v1791 = vrot.slane %v1504, 5
  %v1792 = vrot.slane %v1507, 6
  %v1793 = vor.u32 %v1791, %v1792
  %v1794 = vsel %vm1444, %v1790, %v1793
  %v1795 = vrot.slane %v1513, 5
  %v1796 = vrot.slane %v1516, 6
  %v1797 = vor.u32 %v1795, %v1796
  %v1798 = vsel %vm1444, %v1793, %v1797
  %v1799 = vrot.slane %v1522, 5
  %v1800 = vrot.slane %v1525, 6
  %v1801 = vor.u32 %v1799, %v1800
  %v1802 = vsel %vm1444, %v1797, %v1801
  %v1803 = vrot.slane %v1531, 5
  %v1804 = vrot.slane %v1534, 6
  %v1805 = vor.u32 %v1803, %v1804
  %v1806 = vsel %vm1444, %v1801, %v1805
  %1807 = vrot.lane.b32.xlu0 %v1794, 32
  %v1808 = vpop.permute.xlu0 %1807
  %1809 = vrot.lane.b32.xlu0 %v1798, 32
  %v1810 = vpop.permute.xlu0 %1809
  %1811 = vrot.lane.b32.xlu0 %v1802, 32
  %v1812 = vpop.permute.xlu0 %1811
  %1813 = vrot.lane.b32.xlu0 %v1806, 32
  %v1814 = vpop.permute.xlu0 %1813
  %1815 = vrot.lane.b32.xlu0 %v1805, 32
  %v1816 = vpop.permute.xlu0 %1815
  %1822 = vst.msk [vmem:[#allocation2 + $0x28] sm:$0xff] %vm1479, %v1808
  %1823 = vst.msk [vmem:[#allocation2 + $0x30] sm:$0xff] %vm1479, %v1810
  %1824 = vst.msk [vmem:[#allocation2 + $0x38] sm:$0xff] %vm1479, %v1812
  %1825 = vst.msk [vmem:[#allocation2 + $0x40] sm:$0xff] %vm1479, %v1814
  %v1826 = vld [vmem:[#allocation2 + $0x48] sm:$0x7]
  %v1827 = vsel %vm1485, %v1816, %v1826
  %1828 = vst [vmem:[#allocation2 + $0x48] sm:$0x7] %v1827
  %v1829 = vld [vmem:[#allocation2] sm:$0xff]
  %v1830 = vld [vmem:[#allocation2 + $0x8] sm:$0xff]
  %v1831 = vld [vmem:[#allocation2 + $0x10] sm:$0xff]
  %v1832 = vld [vmem:[#allocation2 + $0x18] sm:$0xff]
  %v1833 = vld [vmem:[#allocation2 + $0x20] sm:$0xff]
  %v1834 = vld [vmem:[#allocation2 + $0x28] sm:$0xff]
  %v1835 = vld [vmem:[#allocation2 + $0x30] sm:$0xff]
  %v1836 = vld [vmem:[#allocation2 + $0x38] sm:$0xff]
  %v1837 = vld [vmem:[#allocation2 + $0x40] sm:$0xff]
  %v1838 = vld [vmem:[#allocation2 + $0x48] sm:$0xff]
  %v1839 = vld [vmem:[%s4] sm:$0xf]
  %v1840 = vld [vmem:[%s4 + $0x4] sm:$0xf]
  %v1841 = vld [vmem:[%s4 + $0x8] sm:$0xf]
  %v1842 = vld [vmem:[%s4 + $0xc] sm:$0xf]
  %v1843 = vld [vmem:[%s4 + $0x10] sm:$0x3]
  %v1849 = vunpack.c.l.b16 %v1839
  %v1850 = vunpack.c.l.b16 %v1840
  %v1851 = vunpack.c.l.b16 %v1841
  %v1852 = vunpack.c.l.b16 %v1842
  %v1853 = vunpack.c.l.b16 %v1843
  %v1854 = vpack.c.b16 %v1850, %v1849
  %v1855 = vpack.c.b16 %v1852, %v1851
  %v1856 = vpack.c.b16 %v1853, %v1853
  %v1860 = vsel %vm117, %v1829, 0
  %v1863 = vsel %vm117, %v1830, 0
  %v1866 = vsel %vm117, %v1831, 0
  %v1869 = vsel %vm117, %v1832, 0
  %v1872 = vsel %vm117, %v1833, 0
  %v1875 = vsel %vm117, %v1834, 0
  %v1878 = vsel %vm117, %v1835, 0
  %v1881 = vsel %vm117, %v1836, 0
  %v1884 = vsel %vm117, %v1837, 0
  %v1887 = vsel %vm117, %v1838, 0
  %v1890 = vsel %vm148, %v1856, 0
  %1892 = vmatprep.subr.bf16.mxu0 0
  %1893 = vmatpush1.bf16.msra.mxu0 %v1854
  %1894 = vmatprep.subr.bf16.mxu0 0
  %1895 = vmatpush1.bf16.msra.mxu0 %v1855
  %1896 = vmatprep.subr.bf16.mxu0 0
  %1897 = vmatpush1.bf16.msra.mxu0 %v1890
  %1898 = vmatprep.subr.bf16.mxu0 0
  %1899 = vmatpush1.bf16.msra.mxu0 0
  %1900 = vmatprep.subr.bf16.mxu0 0
  %1901 = vmatpush1.bf16.msra.mxu0 0
  %1902 = vmatprep.subr.bf16.mxu0 0
  %1903 = vmatpush1.bf16.msra.mxu0 0
  %1904 = vmatprep.subr.bf16.mxu0 0
  %1905 = vmatpush1.bf16.msra.mxu0 0
  %1906 = vmatprep.subr.bf16.mxu0 0
  %1907 = vmatpush1.bf16.msra.mxu0 0
  %1908 = vmatprep.subr.bf16.mxu0 0
  %1909 = vmatpush1.bf16.msra.mxu0 0
  %1910 = vmatprep.subr.bf16.mxu0 0
  %1911 = vmatpush1.bf16.msra.mxu0 0
  %1912 = vmatprep.subr.bf16.mxu0 0
  %1913 = vmatpush1.bf16.msra.mxu0 0
  %1914 = vmatprep.subr.bf16.mxu0 0
  %1915 = vmatpush1.bf16.msra.mxu0 0
  %1916 = vmatprep.subr.bf16.mxu0 0
  %1917 = vmatpush1.bf16.msra.mxu0 0
  %1918 = vmatprep.subr.bf16.mxu0 0
  %1919 = vmatpush1.bf16.msra.mxu0 0
  %1920 = vmatprep.subr.bf16.mxu0 0
  %1921 = vmatpush1.bf16.msra.mxu0 0
  %1922 = vmatprep.subr.bf16.mxu0 0
  %1923 = vmatpush1.bf16.msra.mxu0 0
  %1924 = vmatprep.mubr.bf16.mxu0 0
  %1925 = vmatmul.mubr.bf16.gmra.mrb[0].mxu0 %v1860
  %v1926 = vpop.f32.mrb[0].mxu0
  %v1927 = vadd.f32 0.0, %v1926
  %v1928 = vpop.f32.mrb[0].mxu0
  %v1929 = vpop.f32.mrb[0].mxu0
  %v1930 = vadd.f32 0.0, %v1929
  %v1931 = vpop.f32.mrb[0].mxu0
  %1932 = vmatprep.mubr.bf16.mxu0 0
  %1933 = vmatmul.mubr.bf16.gmra.mrb[0].mxu0 %v1863
  %v1934 = vpop.f32.mrb[0].mxu0
  %v1935 = vadd.f32 0.0, %v1934
  %v1936 = vpop.f32.mrb[0].mxu0
  %v1937 = vpop.f32.mrb[0].mxu0
  %v1938 = vadd.f32 0.0, %v1937
  %v1939 = vpop.f32.mrb[0].mxu0
  %1940 = vmatprep.mubr.bf16.mxu0 0
  %1941 = vmatmul.mubr.bf16.gmra.mrb[0].mxu0 %v1866
  %v1942 = vpop.f32.mrb[0].mxu0
  %v1943 = vadd.f32 0.0, %v1942
  %v1944 = vpop.f32.mrb[0].mxu0
  %v1945 = vpop.f32.mrb[0].mxu0
  %v1946 = vadd.f32 0.0, %v1945
  %v1947 = vpop.f32.mrb[0].mxu0
  %1948 = vmatprep.mubr.bf16.mxu0 0
  %1949 = vmatmul.mubr.bf16.gmra.mrb[0].mxu0 %v1869
  %v1950 = vpop.f32.mrb[0].mxu0
  %v1951 = vadd.f32 0.0, %v1950
  %v1952 = vpop.f32.mrb[0].mxu0
  %v1953 = vpop.f32.mrb[0].mxu0
  %v1954 = vadd.f32 0.0, %v1953
  %v1955 = vpop.f32.mrb[0].mxu0
  %1956 = vmatprep.mubr.bf16.mxu0 0
  %1957 = vmatmul.mubr.bf16.gmra.mrb[0].mxu0 %v1872
  %v1958 = vpop.f32.mrb[0].mxu0
  %v1959 = vadd.f32 0.0, %v1958
  %v1960 = vpop.f32.mrb[0].mxu0
  %v1961 = vpop.f32.mrb[0].mxu0
  %v1962 = vadd.f32 0.0, %v1961
  %v1963 = vpop.f32.mrb[0].mxu0
  %1964 = vmatprep.mubr.bf16.mxu0 0
  %1965 = vmatmul.mubr.bf16.gmra.mrb[0].mxu0 %v1875
  %v1966 = vpop.f32.mrb[0].mxu0
  %v1967 = vadd.f32 0.0, %v1966
  %v1968 = vpop.f32.mrb[0].mxu0
  %v1969 = vpop.f32.mrb[0].mxu0
  %v1970 = vadd.f32 0.0, %v1969
  %v1971 = vpop.f32.mrb[0].mxu0
  %1972 = vmatprep.mubr.bf16.mxu0 0
  %1973 = vmatmul.mubr.bf16.gmra.mrb[0].mxu0 %v1878
  %v1974 = vpop.f32.mrb[0].mxu0
  %v1975 = vadd.f32 0.0, %v1974
  %v1976 = vpop.f32.mrb[0].mxu0
  %v1977 = vpop.f32.mrb[0].mxu0
  %v1978 = vadd.f32 0.0, %v1977
  %v1979 = vpop.f32.mrb[0].mxu0
  %1980 = vmatprep.mubr.bf16.mxu0 0
  %1981 = vmatmul.mubr.bf16.gmra.mrb[0].mxu0 %v1881
  %v1982 = vpop.f32.mrb[0].mxu0
  %v1983 = vadd.f32 0.0, %v1982
  %v1984 = vpop.f32.mrb[0].mxu0
  %v1985 = vpop.f32.mrb[0].mxu0
  %v1986 = vadd.f32 0.0, %v1985
  %v1987 = vpop.f32.mrb[0].mxu0
  %1988 = vmatprep.mubr.bf16.mxu0 0
  %1989 = vmatmul.mubr.bf16.gmra.mrb[0].mxu0 %v1884
  %v1990 = vpop.f32.mrb[0].mxu0
  %v1991 = vadd.f32 0.0, %v1990
  %v1992 = vpop.f32.mrb[0].mxu0
  %v1993 = vpop.f32.mrb[0].mxu0
  %v1994 = vadd.f32 0.0, %v1993
  %v1995 = vpop.f32.mrb[0].mxu0
  %1996 = vmatprep.mubr.bf16.mxu0 0
  %1997 = vmatmul.mubr.bf16.gmra.mrb[0].mxu0 %v1887
  %v1998 = vpop.f32.mrb[0].mxu0
  %v1999 = vadd.f32 0.0, %v1998
  %v2000 = vpop.f32.mrb[0].mxu0
  %v2001 = vpop.f32.mrb[0].mxu0
  %v2002 = vadd.f32 0.0, %v2001
  %v2003 = vpop.f32.mrb[0].mxu0
  %2004 = vdwg.mxu0
  %v2005 = vld [vmem:[%s5] sm:$0x1]
  %v2007 = vlaneseq
  %v2008 = vshrl.u32 %v2007, 7
  %v2009 = vsub.s32 0, %v2008
  %v2010 = vrot.slane %v2005, %v2009
  %v2012 = vmul.f32 %v1927, %v2010
  %v2013 = vmul.f32 %v1930, %v2010
  %v2014 = vmul.f32 %v1935, %v2010
  %v2015 = vmul.f32 %v1938, %v2010
  %v2016 = vmul.f32 %v1943, %v2010
  %v2017 = vmul.f32 %v1946, %v2010
  %v2018 = vmul.f32 %v1951, %v2010
  %v2019 = vmul.f32 %v1954, %v2010
  %v2020 = vmul.f32 %v1959, %v2010
  %v2021 = vmul.f32 %v1962, %v2010
  %v2022 = vmul.f32 %v1967, %v2010
  %v2023 = vmul.f32 %v1970, %v2010
  %v2024 = vmul.f32 %v1975, %v2010
  %v2025 = vmul.f32 %v1978, %v2010
  %v2026 = vmul.f32 %v1983, %v2010
  %v2027 = vmul.f32 %v1986, %v2010
  %v2028 = vmul.f32 %v1991, %v2010
  %v2029 = vmul.f32 %v1994, %v2010
  %v2030 = vmul.f32 %v1999, %v2010
  %v2031 = vmul.f32 %v2002, %v2010
  %v2032 = vld [vmem:[%s6] sm:$0x1]
  %v2034 = vlaneseq
  %v2035 = vshrl.u32 %v2034, 7
  %v2036 = vsub.s32 0, %v2035
  %v2037 = vrot.slane %v2032, %v2036
  %v2039 = vadd.f32 %v2012, %v2037
  %v2040 = vadd.f32 %v2013, %v2037
  %v2041 = vadd.f32 %v2014, %v2037
  %v2042 = vadd.f32 %v2015, %v2037
  %v2043 = vadd.f32 %v2016, %v2037
  %v2044 = vadd.f32 %v2017, %v2037
  %v2045 = vadd.f32 %v2018, %v2037
  %v2046 = vadd.f32 %v2019, %v2037
  %v2047 = vadd.f32 %v2020, %v2037
  %v2048 = vadd.f32 %v2021, %v2037
  %v2049 = vadd.f32 %v2022, %v2037
  %v2050 = vadd.f32 %v2023, %v2037
  %v2051 = vadd.f32 %v2024, %v2037
  %v2052 = vadd.f32 %v2025, %v2037
  %v2053 = vadd.f32 %v2026, %v2037
  %v2054 = vadd.f32 %v2027, %v2037
  %v2055 = vadd.f32 %v2028, %v2037
  %v2056 = vadd.f32 %v2029, %v2037
  %v2057 = vadd.f32 %v2030, %v2037
  %v2058 = vadd.f32 %v2031, %v2037
  %v2059 = vmul.f32 %v2039, 0.2
  %v2060 = vmul.f32 %v2040, 0.2
  %v2061 = vmul.f32 %v2041, 0.2
  %v2062 = vmul.f32 %v2042, 0.2
  %v2063 = vmul.f32 %v2043, 0.2
  %v2064 = vmul.f32 %v2044, 0.2
  %v2065 = vmul.f32 %v2045, 0.2
  %v2066 = vmul.f32 %v2046, 0.2
  %v2067 = vmul.f32 %v2047, 0.2
  %v2068 = vmul.f32 %v2048, 0.2
  %v2069 = vmul.f32 %v2049, 0.2
  %v2070 = vmul.f32 %v2050, 0.2
  %v2071 = vmul.f32 %v2051, 0.2
  %v2072 = vmul.f32 %v2052, 0.2
  %v2073 = vmul.f32 %v2053, 0.2
  %v2074 = vmul.f32 %v2054, 0.2
  %v2075 = vmul.f32 %v2055, 0.2
  %v2076 = vmul.f32 %v2056, 0.2
  %v2077 = vmul.f32 %v2057, 0.2
  %v2078 = vmul.f32 %v2058, 0.2
  %v2079 = vmax.f32 %v2039, %v2059
  %v2080 = vmax.f32 %v2040, %v2060
  %v2081 = vmax.f32 %v2041, %v2061
  %v2082 = vmax.f32 %v2042, %v2062
  %v2083 = vmax.f32 %v2043, %v2063
  %v2084 = vmax.f32 %v2044, %v2064
  %v2085 = vmax.f32 %v2045, %v2065
  %v2086 = vmax.f32 %v2046, %v2066
  %v2087 = vmax.f32 %v2047, %v2067
  %v2088 = vmax.f32 %v2048, %v2068
  %v2089 = vmax.f32 %v2049, %v2069
  %v2090 = vmax.f32 %v2050, %v2070
  %v2091 = vmax.f32 %v2051, %v2071
  %v2092 = vmax.f32 %v2052, %v2072
  %v2093 = vmax.f32 %v2053, %v2073
  %v2094 = vmax.f32 %v2054, %v2074
  %v2095 = vmax.f32 %v2055, %v2075
  %v2096 = vmax.f32 %v2056, %v2076
  %v2097 = vmax.f32 %v2057, %v2077
  %v2098 = vmax.f32 %v2058, %v2078
  %v2099 = vpack.c.bf16 %v2080, %v2079
  %v2100 = vpack.c.bf16 %v2082, %v2081
  %v2101 = vpack.c.bf16 %v2084, %v2083
  %v2102 = vpack.c.bf16 %v2086, %v2085
  %v2103 = vpack.c.bf16 %v2088, %v2087
  %v2104 = vpack.c.bf16 %v2090, %v2089
  %v2105 = vpack.c.bf16 %v2092, %v2091
  %v2106 = vpack.c.bf16 %v2094, %v2093
  %v2107 = vpack.c.bf16 %v2096, %v2095
  %v2108 = vpack.c.bf16 %v2098, %v2097
  %v2119 = vunpack.c.l.b16 %v2099
  %v2120 = vunpack.c.h.b16 %v2099
  %v2121 = vunpack.c.l.b16 %v2100
  %v2122 = vunpack.c.h.b16 %v2100
  %v2123 = vunpack.c.l.b16 %v2101
  %v2124 = vunpack.c.h.b16 %v2101
  %v2125 = vunpack.c.l.b16 %v2102
  %v2126 = vunpack.c.h.b16 %v2102
  %v2127 = vunpack.c.l.b16 %v2103
  %v2128 = vunpack.c.h.b16 %v2103
  %v2129 = vunpack.c.l.b16 %v2104
  %v2130 = vunpack.c.h.b16 %v2104
  %v2131 = vunpack.c.l.b16 %v2105
  %v2132 = vunpack.c.h.b16 %v2105
  %v2133 = vunpack.c.l.b16 %v2106
  %v2134 = vunpack.c.h.b16 %v2106
  %v2135 = vunpack.c.l.b16 %v2107
  %v2136 = vunpack.c.h.b16 %v2107
  %v2137 = vunpack.c.l.b16 %v2108
  %v2138 = vunpack.c.h.b16 %v2108
  %v2139 = vpack.c.b16 %v2119, %v2119
  %v2140 = vpack.c.b16 %v2120, %v2120
  %v2141 = vpack.c.b16 %v2121, %v2121
  %v2142 = vpack.c.b16 %v2122, %v2122
  %v2143 = vpack.c.b16 %v2123, %v2123
  %v2144 = vpack.c.b16 %v2124, %v2124
  %v2145 = vpack.c.b16 %v2125, %v2125
  %v2146 = vpack.c.b16 %v2126, %v2126
  %v2147 = vpack.c.b16 %v2127, %v2127
  %v2148 = vpack.c.b16 %v2128, %v2128
  %v2149 = vpack.c.b16 %v2129, %v2129
  %v2150 = vpack.c.b16 %v2130, %v2130
  %v2151 = vpack.c.b16 %v2131, %v2131
  %v2152 = vpack.c.b16 %v2132, %v2132
  %v2153 = vpack.c.b16 %v2133, %v2133
  %v2154 = vpack.c.b16 %v2134, %v2134
  %v2155 = vpack.c.b16 %v2135, %v2135
  %v2156 = vpack.c.b16 %v2136, %v2136
  %v2157 = vpack.c.b16 %v2137, %v2137
  %v2158 = vpack.c.b16 %v2138, %v2138
  %vm2179 = vcmask 60416
  %2180 = vst.msk [vmem:[%s7] sm:$0xf] %vm2179, %v2139
  %2181 = vst.msk [vmem:[%s7 + $0x4] sm:$0xf] %vm2179, %v2140
  %2182 = vst.msk [vmem:[%s7 + $0x8] sm:$0xf] %vm2179, %v2141
  %2183 = vst.msk [vmem:[%s7 + $0xc] sm:$0xf] %vm2179, %v2142
  %2184 = vst.msk [vmem:[%s7 + $0x10] sm:$0xf] %vm2179, %v2143
  %2185 = vst.msk [vmem:[%s7 + $0x14] sm:$0xf] %vm2179, %v2144
  %2186 = vst.msk [vmem:[%s7 + $0x18] sm:$0xf] %vm2179, %v2145
  %2187 = vst.msk [vmem:[%s7 + $0x1c] sm:$0xf] %vm2179, %v2146
  %2188 = vst.msk [vmem:[%s7 + $0x20] sm:$0xf] %vm2179, %v2147
  %2189 = vst.msk [vmem:[%s7 + $0x24] sm:$0xf] %vm2179, %v2148
  %2190 = vst.msk [vmem:[%s7 + $0x28] sm:$0xf] %vm2179, %v2149
  %2191 = vst.msk [vmem:[%s7 + $0x2c] sm:$0xf] %vm2179, %v2150
  %2192 = vst.msk [vmem:[%s7 + $0x30] sm:$0xf] %vm2179, %v2151
  %2193 = vst.msk [vmem:[%s7 + $0x34] sm:$0xf] %vm2179, %v2152
  %2194 = vst.msk [vmem:[%s7 + $0x38] sm:$0xf] %vm2179, %v2153
  %2195 = vst.msk [vmem:[%s7 + $0x3c] sm:$0xf] %vm2179, %v2154
  %2196 = vst.msk [vmem:[%s7 + $0x40] sm:$0xf] %vm2179, %v2155
  %2197 = vst.msk [vmem:[%s7 + $0x44] sm:$0xf] %vm2179, %v2156
  %2198 = vst.msk [vmem:[%s7 + $0x48] sm:$0xf] %vm2179, %v2157
  %2199 = vst.msk [vmem:[%s7 + $0x4c] sm:$0xf] %vm2179, %v2158
  // Predicated region
  $region30: #{_lambda_.1} parent=0 // pred_check
    _
  $region31: #{_lambda_.1} parent=0 // pred_check_branch
    %2201 = sbr.rel (0) target = $region33
  $region32: #{_lambda_.1} parent=0 // pred_region
    _
  $region33: #{_lambda_.1} parent=0 // pred_fallthru
    _
  // Predicated region
  $region34: #{_lambda_.1} parent=0 // pred_check
    _
  $region35: #{_lambda_.1} parent=0 // pred_check_branch
    %2203 = sbr.rel (0) target = $region37
  $region36: #{_lambda_.1} parent=0 // pred_region
    _
  $region37: #{_lambda_.1} parent=0 // pred_fallthru
    _

</llo_original>
